<compile_context>
chip_gen: v5e
topology: v5e:2x2
jax: 0.10.0
libtpu: 0.0.40
codegen_flags: <defaults>
</compile_context>

<pallas_src>
import functools
import numpy as np
import jax
import jax.numpy as jnp
from jax import lax
from jax.experimental import pallas as pl
from jax.experimental.pallas import tpu as pltpu

BN_EPS = 1e-5
REDUCTION_DIM = 2048           # DELG global descriptor dim (GlobalHead fc output)
# TODO(synk): ResNet depth is cfg-driven in delg_utils (ResNet-50 = (3,4,6,3) bottleneck blocks);
#             one block per stage keeps the synthetic demo small.  Channel widths
#             (64/256/512/1024/2048, block3 = 1024 ch) match the real model exactly.
DEPTHS = (1, 1, 1, 1)


def _vmem_limit_bytes():
    # Generation-aware scoped-VMEM limit (128 MiB on v5e/v6e, 64 MiB on v7x).
    try:
        cap = int(pltpu.get_tpu_info().vmem_capacity_bytes)
    except Exception:
        cap = 64 * 1024 * 1024
    return min(int(cap * 3 // 4), 100 * 1024 * 1024)


VMEM_LIMIT = _vmem_limit_bytes()


# ----------------------------- small helpers -----------------------------

def _round_up(x, m):
    return ((x + m - 1) // m) * m


def _tile_rows(M, cap):
    tm = cap if M >= cap else _round_up(M, 8)
    return tm, _round_up(M, tm)


def _row_tile(n, cap=8):
    t = min(n, cap)
    while n % t:
        t -= 1
    return t


def _cp(n_grid_dims):
    return pltpu.CompilerParams(
        dimension_semantics=("parallel",) * n_grid_dims,
        vmem_limit_bytes=VMEM_LIMIT)


# ----------------------------- fused matmul + BN/ReLU/residual -----------------------------

def _matmul_affine_kernel(*refs, apply_relu, has_residual):
    # out = maybe_relu((X @ W) * scale + shift [+ residual])   (BN / bias folded into scale/shift)
    if has_residual:
        x_ref, w_ref, scale_ref, shift_ref, r_ref, o_ref = refs
    else:
        x_ref, w_ref, scale_ref, shift_ref, o_ref = refs
    acc = jnp.dot(x_ref[...], w_ref[...], preferred_element_type=jnp.float32)
    out = acc * scale_ref[...] + shift_ref[...]
    if has_residual:
        out = out + r_ref[...].astype(jnp.float32)
    if apply_relu:
        out = jnp.maximum(out, 0.0)
    o_ref[...] = out.astype(o_ref.dtype)


def matmul_affine(x, w, scale, shift, *, apply_relu, residual=None,
                  out_dtype=jnp.float32, compute_dtype=jnp.bfloat16):
    """Fused (x @ w) * scale + shift (+residual) (+ReLU).

    x:(M,K) w:(K,N) scale/shift:(N,) residual:(M,N)|None.  bf16 MXU inputs (f32 for the tiny FC),
    f32 accumulate + f32 epilogue.  Weight-stationary grid (N outer, M inner) so the (K, tn)
    weight tile stays resident across the M sweep.
    """
    x = x.astype(compute_dtype)
    w = w.astype(compute_dtype)
    M, K = x.shape
    N = w.shape[1]

    Kp = _round_up(K, 8)                              # ragged K never happens after init padding,
    if Kp != K:                                       # kept as a cheap safety net
        x = jnp.pad(x, ((0, 0), (0, Kp - K)))
        w = jnp.pad(w, ((0, Kp - K), (0, 0)))
        K = Kp

    Np = _round_up(N, 128)                            # weights are pre-padded -> normally Np == N
    if Np != N:
        w = jnp.pad(w, ((0, 0), (0, Np - N)))
        scale = jnp.pad(scale, (0, Np - N))
        shift = jnp.pad(shift, (0, Np - N))
        if residual is not None:
            residual = jnp.pad(residual, ((0, 0), (0, Np - N)))

    tm, Mp = _tile_rows(M, 512)
    if Mp != M:
        x = jnp.pad(x, ((0, Mp - M), (0, 0)))
        if residual is not None:
            residual = jnp.pad(residual, ((0, Mp - M), (0, 0)))

    if Np % 512 == 0:
        tn = 512
    elif Np % 256 == 0:
        tn = 256
    else:
        tn = 128

    args = [x, w,
            scale.astype(jnp.float32).reshape(1, Np),
            shift.astype(jnp.float32).reshape(1, Np)]
    in_specs = [
        pl.BlockSpec((tm, K), lambda j, i: (i, 0)),
        pl.BlockSpec((K, tn), lambda j, i: (0, j)),   # constant across inner i -> stays resident
        pl.BlockSpec((1, tn), lambda j, i: (0, j)),
        pl.BlockSpec((1, tn), lambda j, i: (0, j)),
    ]
    if residual is not None:
        args.append(residual.astype(compute_dtype))
        in_specs.append(pl.BlockSpec((tm, tn), lambda j, i: (i, j)))

    out = pl.pallas_call(
        functools.partial(_matmul_affine_kernel, apply_relu=apply_relu,
                          has_residual=residual is not None),
        out_shape=jax.ShapeDtypeStruct((Mp, Np), out_dtype),
        grid=(Np // tn, Mp // tm),                    # N outer, M inner (weight reuse)
        in_specs=in_specs,
        out_specs=pl.BlockSpec((tm, tn), lambda j, i: (i, j)),
        compiler_params=_cp(2),
    )(*args)
    if Mp != M or Np != N:
        out = out[:M, :N]
    return out


# ----------------------------- direct stride-1 3x3 conv -----------------------------

def _conv3x3_kernel(x_ref, w_ref, scale_ref, shift_ref, o_ref, acc_ref, *, W, TR, apply_relu):
    # x_ref : (1, H+2, W+2, Cin) padded bf16 map for one batch element (resident across row tiles)
    # w_ref : (3, 3*Cin, Cout) bf16, row-tap major ([ky][kx*Cin + cin][cout])
    # o_ref : (1, TR*W, Cout)
    # acc_ref: (TR*W, Cout) f32 VMEM scratch accumulator
    r = pl.program_id(1)
    Cin = x_ref.shape[3]
    row0 = r * TR
    for ky in range(3):
        rows = x_ref[0, pl.ds(row0 + ky, TR), :, :]                       # (TR, W+2, Cin)
        slab = jnp.concatenate([rows[:, 0:W, :], rows[:, 1:W + 1, :],
                                rows[:, 2:W + 2, :]], axis=-1)            # (TR, W, 3*Cin)
        contrib = jnp.dot(slab.reshape(TR * W, 3 * Cin), w_ref[ky],
                          preferred_element_type=jnp.float32)
        if ky == 0:
            acc_ref[...] = contrib
        else:
            acc_ref[...] += contrib
    out = acc_ref[...] * scale_ref[...] + shift_ref[...]
    if apply_relu:
        out = jnp.maximum(out, 0.0)
    o_ref[0] = out.astype(o_ref.dtype)


def conv3x3_bn_act_direct(x, cp, relu, out_dtype=jnp.float32):
    """3x3 / stride-1 / pad-1 conv + folded BN (+ReLU), 3 row-tap matmuls, row-tiled grid."""
    B, H, W, Cin = x.shape
    Cout = cp['w'].shape[-1]
    # TODO(synk): build the zero halo in a VMEM scratch inside the kernel to avoid this HBM pad.
    xp = jnp.pad(x.astype(jnp.bfloat16), ((0, 0), (1, 1), (1, 1), (0, 0)))
    w3 = cp['w'].astype(jnp.bfloat16).reshape(3, 3 * Cin, Cout)           # (ky, kx*Cin+cin, cout)
    TR = _row_tile(H)
    out = pl.pallas_call(
        functools.partial(_conv3x3_kernel, W=W, TR=TR, apply_relu=relu),
        out_shape=jax.ShapeDtypeStruct((B, H * W, Cout), out_dtype),
        grid=(B, H // TR),
        in_specs=[
            pl.BlockSpec((1, H + 2, W + 2, Cin), lambda b, r: (b, 0, 0, 0)),
            pl.BlockSpec((3, 3 * Cin, Cout), lambda b, r: (0, 0, 0)),
            pl.BlockSpec((1, Cout), lambda b, r: (0, 0)),
            pl.BlockSpec((1, Cout), lambda b, r: (0, 0)),
        ],
        out_specs=pl.BlockSpec((1, TR * W, Cout), lambda b, r: (b, r, 0)),
        scratch_shapes=[pltpu.VMEM((TR * W, Cout), jnp.float32)],
        compiler_params=_cp(2),
    )(xp, w3, cp['scale'].reshape(1, Cout), cp['shift'].reshape(1, Cout))
    return out.reshape(B, H, W, Cout)


# ----------------------------- fused 3x3 / stride-2 max-pool -----------------------------

def _maxpool_kernel(x_ref, o_ref, *, TR, Wo, C):
    # x_ref: (1, H+2, (W+2)//2, 2C)  padded + column-paired map (even cols in [:C], odd in [C:])
    # o_ref: (1, TR, Wo, C)
    r = pl.program_id(1)
    for i in range(TR):
        base = 2 * (r * TR + i)
        rm = jnp.maximum(jnp.maximum(x_ref[0, base], x_ref[0, base + 1]),
                         x_ref[0, base + 2])                              # ((W+2)//2, 2C)
        even = rm[:, :C]                                                  # padded col 2q
        odd = rm[:, C:]                                                   # padded col 2q+1
        m = jnp.maximum(jnp.maximum(even[:Wo, :], odd[:Wo, :]), even[1:Wo + 1, :])
        o_ref[0, i] = m.astype(o_ref.dtype)


def maxpool_3x3_s2(x):
    """3x3 stride-2 pad-1 max-pool: one kernel, one read of the padded map (no 9 HBM views)."""
    B, H, W, C = x.shape
    Ho, Wo = H // 2, W // 2
    xp = jnp.pad(x, ((0, 0), (1, 1), (1, 1), (0, 0)), constant_values=-jnp.inf)
    Hp, Wp = H + 2, W + 2
    xp = xp.reshape(B, Hp, Wp // 2, 2 * C)       # free HBM reshape: even/odd columns -> lane halves
    TR = _row_tile(Ho)
    out = pl.pallas_call(
        functools.partial(_maxpool_kernel, TR=TR, Wo=Wo, C=C),
        out_shape=jax.ShapeDtypeStruct((B, Ho, Wo, C), x.dtype),
        grid=(B, Ho // TR),
        in_specs=[pl.BlockSpec((1, Hp, Wp // 2, 2 * C), lambda b, r: (b, 0, 0, 0))],
        out_specs=pl.BlockSpec((1, TR, Wo, C), lambda b, r: (b, r, 0, 0)),
        compiler_params=_cp(2),
    )(xp)
    return out


# ----------------------------- GeM pooling -----------------------------

def _gem_kernel(x_ref, o_ref, *, eps, inv_hw):
    # GeM with p=3: (mean over spatial of clamp(x, eps)^3)^(1/3)   (x*x*x keeps it on the VALU)
    x = jnp.maximum(x_ref[0].astype(jnp.float32), eps)         # (HW, C)
    m = jnp.sum(x * x * x, axis=0, keepdims=True) * inv_hw     # (1, C)
    o_ref[0] = m ** (1.0 / 3.0)


def gem_pool(x, eps=1e-6):
    B, H, W, C = x.shape
    hw = H * W
    out = pl.pallas_call(
        functools.partial(_gem_kernel, eps=eps, inv_hw=1.0 / hw),
        out_shape=jax.ShapeDtypeStruct((B, 1, C), jnp.float32),
        grid=(B,),
        in_specs=[pl.BlockSpec((1, hw, C), lambda b: (b, 0, 0))],
        out_specs=pl.BlockSpec((1, 1, C), lambda b: (b, 0, 0)),
        compiler_params=_cp(1),
    )(x.reshape(B, hw, C))
    return out.reshape(B, C)


# ----------------------------- SpatialAttention2d head -----------------------------

def _attention_kernel(x_ref, w1_ref, s1_ref, sh1_ref, w2_ref, b2_ref, feat_ref, att_ref):
    # Fused SpatialAttention2d: conv1(1x1)+BN -> L2-normalize | ReLU -> conv2(1x1) -> Softplus.
    bn = jnp.dot(x_ref[...], w1_ref[...],
                 preferred_element_type=jnp.float32) * s1_ref[...] + sh1_ref[...]
    ss = jnp.sum(bn * bn, axis=1, keepdims=True)
    feat_norm = bn * lax.rsqrt(jnp.maximum(ss, 1e-24))                    # F.normalize(x, 2, C)
    act = jnp.maximum(bn, 0.0)
    s = jnp.sum(act * w2_ref[...], axis=1, keepdims=True) + b2_ref[...]   # 1024->1 on VPU/XLU
    att = jnp.where(s > 20.0, s, jnp.log1p(jnp.exp(jnp.minimum(s, 20.0))))  # Softplus(1, thr=20)
    feat_ref[...] = (att * feat_norm).astype(feat_ref.dtype)
    att_ref[...] = att[:, 0].astype(att_ref.dtype)                        # lane-dense 1-D store


def spatial_attention(feamap_nhwc, ap):
    B, H, W, C = feamap_nhwc.shape
    M = B * H * W
    X = feamap_nhwc.reshape(M, C).astype(jnp.bfloat16)
    tm, Mp = _tile_rows(M, 512)
    if Mp != M:
        X = jnp.pad(X, ((0, Mp - M), (0, 0)))
    n_tiles = Mp // tm
    feat, att = pl.pallas_call(
        _attention_kernel,
        out_shape=(jax.ShapeDtypeStruct((Mp, 1024), jnp.float32),
                   jax.ShapeDtypeStruct((Mp,), jnp.float32)),
        grid=(n_tiles,),
        in_specs=[
            pl.BlockSpec((tm, C), lambda i: (i, 0)),
            pl.BlockSpec((C, 1024), lambda i: (0, 0)),
            pl.BlockSpec((1, 1024), lambda i: (0, 0)),
            pl.BlockSpec((1, 1024), lambda i: (0, 0)),
            pl.BlockSpec((1, 1024), lambda i: (0, 0)),
            pl.BlockSpec((1, 1), lambda i: (0, 0)),
        ],
        out_specs=(pl.BlockSpec((tm, 1024), lambda i: (i, 0)),
                   pl.BlockSpec((tm,), lambda i: (i,))),
        compiler_params=_cp(1),
    )(X, ap['w1'].astype(jnp.bfloat16),
      ap['scale1'].reshape(1, 1024), ap['shift1'].reshape(1, 1024),
      ap['w2'].reshape(1, 1024), ap['b2'].reshape(1, 1))
    local_feature = feat[:M].reshape(B, H, W, 1024).transpose(0, 3, 1, 2)   # back to NCHW
    att_score = att[:M].reshape(B, H, W, 1).transpose(0, 3, 1, 2)
    return local_feature, att_score


# ----------------------------- JAX glue (im2col: stem 7x7/2 and stride-2 3x3) -----------------------------

def im2col(x, k, stride, pad):
    B, H, W, C = x.shape
    if pad > 0:
        x = jnp.pad(x, ((0, 0), (pad, pad), (pad, pad), (0, 0)))
    Hp, Wp = H + 2 * pad, W + 2 * pad
    Ho = (Hp - k) // stride + 1
    Wo = (Wp - k) // stride + 1
    cols = []
    for ky in range(k):
        for kx in range(k):
            cols.append(x[:, ky:ky + stride * (Ho - 1) + 1:stride,
                            kx:kx + stride * (Wo - 1) + 1:stride, :])
    return jnp.concatenate(cols, axis=-1), Ho, Wo


def conv_im2col_bn_act(x, cp, stride, relu, out_dtype=jnp.float32):
    # Only the 7x7/2 stem and the stride-2 3x3 convs take this path.
    k = cp['k']
    pad = (k - 1) // 2
    patches, Ho, Wo = im2col(x.astype(jnp.bfloat16), k, stride, pad)
    B = x.shape[0]
    Kdim = patches.shape[-1]
    w2d = cp['w'].reshape(-1, cp['w'].shape[-1])     # (k*k*cin, cout), tap-major (ky,kx,cin)
    y = matmul_affine(patches.reshape(B * Ho * Wo, Kdim), w2d, cp['scale'], cp['shift'],
                      apply_relu=relu, out_dtype=out_dtype)
    return y.reshape(B, Ho, Wo, -1)


def conv1x1_bn_act(x, cp, stride, relu, residual=None, out_dtype=jnp.float32):
    if stride > 1:
        x = x[:, ::stride, ::stride, :]
    B, H, W, C = x.shape
    w2d = cp['w'].reshape(C, -1)
    res = residual.reshape(B * H * W, -1) if residual is not None else None
    y = matmul_affine(x.reshape(B * H * W, C), w2d, cp['scale'], cp['shift'],
                      apply_relu=relu, residual=res, out_dtype=out_dtype)
    return y.reshape(B, H, W, -1)


# ----------------------------- Model forward -----------------------------

def bottleneck(x, blk):
    s = blk['stride']
    if blk['proj'] is not None:
        sc = conv1x1_bn_act(x, blk['proj'], stride=s, relu=False, out_dtype=jnp.bfloat16)
    else:
        sc = x
    h = conv1x1_bn_act(x, blk['a'], stride=1, relu=True, out_dtype=jnp.bfloat16)        # 1x1
    if s == 1:
        h = conv3x3_bn_act_direct(h, blk['b'], relu=True, out_dtype=jnp.bfloat16)       # direct 3x3
    else:
        # TODO(synk): replace with a direct stride-2 conv (phase split) to kill the 2.25x im2col.
        h = conv_im2col_bn_act(h, blk['b'], stride=s, relu=True, out_dtype=jnp.bfloat16)
    # residual add + ReLU fused into the 'c' conv's matmul epilogue
    return conv1x1_bn_act(h, blk['c'], stride=1, relu=True, residual=sc, out_dtype=jnp.bfloat16)


def resnet_forward(params, x_nhwc):
    # pad image channels (3 -> 8) once so the stem im2col K (49*8=392) is 8-aligned for free
    cin_p = params['stem']['w'].shape[2]
    if x_nhwc.shape[-1] < cin_p:
        x_nhwc = jnp.pad(x_nhwc, ((0, 0), (0, 0), (0, 0), (0, cin_p - x_nhwc.shape[-1])))
    h = conv_im2col_bn_act(x_nhwc, params['stem'], stride=2, relu=True, out_dtype=jnp.bfloat16)
    h = maxpool_3x3_s2(h)                                          # fused 3x3/2 max-pool
    feamap = None
    for si, blocks in enumerate(params['stages']):
        for blk in blocks:
            h = bottleneck(h, blk)
        if si == 2:                                                # block3: 1024-channel map
            feamap = h
    pooled = gem_pool(h)                                           # GeM pooling (p = 3)
    ones = jnp.ones((REDUCTION_DIM,), jnp.float32)
    # keep the tiny global-descriptor FC in f32 (M = B), per review precision note
    global_feature = matmul_affine(pooled, params['fc_w'], ones, params['fc_b'],
                                   apply_relu=False, out_dtype=jnp.float32,
                                   compute_dtype=jnp.float32)
    return global_feature, feamap


def delg_extraction(params, x_nchw, targets):
    x_nhwc = jnp.transpose(x_nchw, (0, 2, 3, 1))
    global_feature, feamap = resnet_forward(params['resnet'], x_nhwc)
    block3 = lax.stop_gradient(feamap)              # feamap.detach()
    local_feature, att_score = spatial_attention(block3, params['attn'])
    return global_feature, local_feature, att_score   # targets unused (matches PyTorch forward)


# ----------------------------- Deterministic parameter init -----------------------------

class _KeyGen:
    def __init__(self, seed):
        self._key = jax.random.PRNGKey(seed)

    def __call__(self):
        self._key, k = jax.random.split(self._key)
        return k


def _bn_affine(kg, c):
    gamma = 1.0 + 0.02 * jax.random.normal(kg(), (c,), jnp.float32)
    beta = 0.02 * jax.random.normal(kg(), (c,), jnp.float32)
    mean = 0.02 * jax.random.normal(kg(), (c,), jnp.float32)
    var = 1.0 + 0.02 * jax.random.uniform(kg(), (c,), jnp.float32)
    a = gamma * lax.rsqrt(var + BN_EPS)
    b = beta - mean * a
    return a, b


def _conv_bn(kg, cin, cout, k, cin_pad=None, cout_pad=None):
    # Weights are stored as (k, k, cin_phys, cout_phys), zero-padded so physical channel counts
    # are lane-dense.  NOTE for real checkpoints: PyTorch (Cout,Cin,kh,kw) must be permuted to
    # (kh,kw,Cin,Cout) before flattening, or the 3x3 convs silently compute a permuted conv.
    cin_p = cin_pad or cin
    cout_p = cout_pad or cout
    fan_in = cin * k * k
    w = jax.random.normal(kg(), (k, k, cin, cout), jnp.float32) * (1.0 / np.sqrt(fan_in))
    scale, shift = _bn_affine(kg, cout)
    if cin_p != cin or cout_p != cout:
        w = jnp.pad(w, ((0, 0), (0, 0), (0, cin_p - cin), (0, cout_p - cout)))
        scale = jnp.pad(scale, (0, cout_p - cout))
        shift = jnp.pad(shift, (0, cout_p - cout))
    return {'w': w.astype(jnp.bfloat16), 'scale': scale, 'shift': shift, 'k': k}


def init_params(seed=0):
    kg = _KeyGen(seed)
    # stem: 7x7/2, 3->64; physically 8->128 (lane-dense, padded rows/cols are exactly zero)
    resnet = {'stem': _conv_bn(kg, 3, 64, 7, cin_pad=8, cout_pad=128)}
    w_in_list = [64, 256, 512, 1024]
    w_out_list = [256, 512, 1024, 2048]
    w_b_list = [64, 128, 256, 512]
    stride_list = [1, 2, 2, 2]
    stages = []
    for si in range(4):
        blocks = []
        w_in = w_in_list[si]
        for bi in range(DEPTHS[si]):
            s = stride_list[si] if bi == 0 else 1
            need_proj = (w_in != w_out_list[si]) or (s != 1)
            wb = w_b_list[si]
            cin_pad = _round_up(w_in, 128)
            wb_pad = _round_up(wb, 128)
            blocks.append({
                'proj': _conv_bn(kg, w_in, w_out_list[si], 1, cin_pad=cin_pad) if need_proj else None,
                'a': _conv_bn(kg, w_in, wb, 1, cin_pad=cin_pad, cout_pad=wb_pad),
                'b': _conv_bn(kg, wb, wb, 3, cin_pad=wb_pad, cout_pad=wb_pad),
                'c': _conv_bn(kg, wb, w_out_list[si], 1, cin_pad=wb_pad),
                'stride': s,
            })
            w_in = w_out_list[si]
        stages.append(blocks)
    resnet['stages'] = stages
    resnet['fc_w'] = (jax.random.normal(kg(), (2048, REDUCTION_DIM), jnp.float32)
                      / np.sqrt(2048))                              # FC kept f32
    resnet['fc_b'] = 0.02 * jax.random.normal(kg(), (REDUCTION_DIM,), jnp.float32)

    # SpatialAttention2d(1024): conv1(1024->1024, bias) + BN, conv2(1024->1, bias), Softplus
    a, b = _bn_affine(kg, 1024)
    w1 = jax.random.normal(kg(), (1024, 1024), jnp.float32) / 32.0
    b1 = 0.02 * jax.random.normal(kg(), (1024,), jnp.float32)
    attn = {
        'w1': w1.astype(jnp.bfloat16),
        'scale1': a,                 # BN scale applied to conv1 output
        'shift1': a * b1 + b,        # = a * (conv1_bias - bn_mean) + bn_beta
        'w2': jax.random.normal(kg(), (1024, 1), jnp.float32) / 32.0,
        'b2': 0.02 * jax.random.normal(kg(), (1, 1), jnp.float32),
    }
    return {'resnet': resnet, 'attn': attn}


# ----------------------------- Demo -----------------------------

if __name__ == "__main__":
    key = jax.random.PRNGKey(0)
    x = jax.random.normal(key, (2, 3, 64, 64), jnp.float32)       # NCHW, like PyTorch
    targets = jnp.zeros((2,), jnp.int32)                          # unused by the forward
    params = init_params(seed=0)

    global_feature, local_feature, att_score = jax.block_until_ready(
        delg_extraction(params, x, targets))

    assert global_feature.shape == (2, REDUCTION_DIM)
    assert local_feature.shape == (2, 1024, 4, 4)                 # block3 spatial = 64/16
    assert att_score.shape == (2, 1, 4, 4)
    print("KERNEL_OK")
</pallas_src>

<mosaic_0001>
module attributes {stable_mosaic.version = 11 : i64} {
  func.func @_matmul_affine_kernel(%arg0: i32, %arg1: i32, %arg2: memref<512x392xbf16, #tpu.memory_space<vmem>>, %arg3: memref<392x128xbf16, #tpu.memory_space<vmem>>, %arg4: memref<1x128xf32, #tpu.memory_space<vmem>>, %arg5: memref<1x128xf32, #tpu.memory_space<vmem>>, %arg6: memref<512x128xbf16, #tpu.memory_space<vmem>>) attributes {dimension_semantics = [#tpu.dimension_semantics<parallel>, #tpu.dimension_semantics<parallel>], iteration_bounds = array<i64: 1, 4>, scalar_prefetch = 0 : i64, scratch_operands = 0 : i64, tpu.core_type = #tpu.core_type<tc>, window_params = [{transform_indices = @transform_0, window_bounds = array<i64: 512, 392>}, {transform_indices = @transform_1, window_bounds = array<i64: 392, 128>}, {transform_indices = @transform_2, window_bounds = array<i64: 1, 128>}, {transform_indices = @transform_3, window_bounds = array<i64: 1, 128>}, {transform_indices = @transform_4, window_bounds = array<i64: 512, 128>}]} {
    %c0 = arith.constant 0 : index
    %c0_0 = arith.constant 0 : index
    %0 = vector.load %arg2[%c0, %c0_0] : memref<512x392xbf16, #tpu.memory_space<vmem>>, vector<512x392xbf16>
    %c0_1 = arith.constant 0 : index
    %c0_2 = arith.constant 0 : index
    %1 = vector.load %arg3[%c0_1, %c0_2] : memref<392x128xbf16, #tpu.memory_space<vmem>>, vector<392x128xbf16>
    %cst = arith.constant dense<0.000000e+00> : vector<512x128xf32>
    %2 = tpu.matmul %0, %1, %cst {dimension_numbers = #tpu.dot_dimension_numbers<[1], [0], [0], [1], [0, 0, 1, 1], [], []>} : vector<512x392xbf16>, vector<392x128xbf16>, vector<512x128xf32> -> vector<512x128xf32>
    %c0_3 = arith.constant 0 : index
    %c0_4 = arith.constant 0 : index
    %3 = vector.load %arg4[%c0_3, %c0_4] : memref<1x128xf32, #tpu.memory_space<vmem>>, vector<1x128xf32>
    %4 = vector.broadcast %3 : vector<1x128xf32> to vector<512x128xf32>
    %5 = arith.mulf %2, %4 : vector<512x128xf32>
    %c0_5 = arith.constant 0 : index
    %c0_6 = arith.constant 0 : index
    %6 = vector.load %arg5[%c0_5, %c0_6] : memref<1x128xf32, #tpu.memory_space<vmem>>, vector<1x128xf32>
    %7 = vector.broadcast %6 : vector<1x128xf32> to vector<512x128xf32>
    %8 = arith.addf %5, %7 : vector<512x128xf32>
    %cst_7 = arith.constant 0.000000e+00 : f32
    %9 = vector.broadcast %cst_7 : f32 to vector<512x128xf32>
    %10 = arith.maximumf %8, %9 : vector<512x128xf32>
    %11 = arith.truncf %10 : vector<512x128xf32> to vector<512x128xbf16>
    %c0_8 = arith.constant 0 : index
    %c0_9 = arith.constant 0 : index
    %12 = vector.load %arg6[%c0_8, %c0_9] : memref<512x128xbf16, #tpu.memory_space<vmem>>, vector<512x128xbf16>
    tpu.vector_store %arg6[%c0_8, %c0_9], %11 {strides = array<i32>} : memref<512x128xbf16, #tpu.memory_space<vmem>>, vector<512x128xbf16>,
    return
  }
  func.func @transform_0(%arg0: i32, %arg1: i32) -> (i32, i32) {
    %c0_i32 = arith.constant 0 : i32
    %c0_i32_0 = arith.constant 0 : i32
    return %arg1, %c0_i32 : i32, i32
  }
  func.func @transform_1(%arg0: i32, %arg1: i32) -> (i32, i32) {
    %c0_i32 = arith.constant 0 : i32
    %c0_i32_0 = arith.constant 0 : i32
    return %c0_i32, %arg0 : i32, i32
  }
  func.func @transform_2(%arg0: i32, %arg1: i32) -> (i32, i32) {
    %c0_i32 = arith.constant 0 : i32
    %c0_i32_0 = arith.constant 0 : i32
    return %c0_i32, %arg0 : i32, i32
  }
  func.func @transform_3(%arg0: i32, %arg1: i32) -> (i32, i32) {
    %c0_i32 = arith.constant 0 : i32
    %c0_i32_0 = arith.constant 0 : i32
    return %c0_i32, %arg0 : i32, i32
  }
  func.func @transform_4(%arg0: i32, %arg1: i32) -> (i32, i32) {
    %c0_i32 = arith.constant 0 : i32
    return %arg1, %arg0 : i32, i32
  }
}

</mosaic_0001>

<llo_original>
// kernel: tpu_custom_call.1
$region0: #{tpu_custom_call.1}
  #allocation0 [shape = 'u32[]', space=smem, size = 0x4, offset = 0x4, fixed_abs, tag = 'smem constant byte address 0x4 - core index']
  #allocation1 [shape = 'u32[72,128]{1,0:T(1,128)}', space=vmem, size = 0x9000, scoped, tag = 'internal scratch']
  %s0 = inlined_call_operand.vmem [shape: bf16[2048,392], index: 0, kind: input, shape index: {}]
  %s1 = inlined_call_operand.vmem [shape: bf16[392,128], index: 1, kind: input, shape index: {}]
  %s2 = inlined_call_operand.vmem [shape: f32[1,128], index: 2, kind: input, shape index: {}]
  %s3 = inlined_call_operand.vmem [shape: f32[1,128], index: 3, kind: input, shape index: {}]
  %s4 = inlined_call_operand.hbm [shape: bf16[2048,128], index: 4, kind: output, shape index: {}]
  %s5 = sld [smem:[#allocation0]]
  $region49: #{tpu_custom_call.1} parent=0
    _
  %s7 = ssub.s32 1, %s5
  %s8 = scalar_select 0, %s7, %s5
  $region1: #{tpu_custom_call.1} parent=0
    #allocation2 [shape = 'u8[262144]{0}', space=vmem, size = 0x40000, scoped, tag = 'output window, operand 0']
    #allocation3 [shape = 's32[2]{0}', space=sflag, size = 0x8, scoped, tag = 'scoped memory for tpu_custom_call.1']
    %9 = vsyncpa [#allocation3], 0
    %s10 = scalar_lea.sflag [#allocation3], 1
    %11 = vsyncpa %s10, 0
    loop: start=0, step=1, limit=6
    $region2: #{tpu_custom_call.1} parent=1 // loop_pre_header
      _
    $region3: #{tpu_custom_call.1} parent=1 // loop_header
      %s13 = sphi 0, %s17
      %p14 = scmp.ge.s32.totalorder %s13, 6
      %s20 = sphi 0, %s32
      %s21 = sphi 0, %s28
      %s22 = sphi 0, %s20
      %s23 = sphi 0, %s21
      %s24 = sphi 0, %s22
      %s25 = sphi 0, %s23
      %s35 = sphi 0, %s37
      %s38 = sphi 0, %s35
      %s39 = sphi 0, %s38
      %s55 = sphi 0, %s39
      %s61 = sphi 0, %s63
      %s64 = sphi 0, %s61
      %s65 = sphi 0, %s64
      %s81 = sphi 0, %s65
      %s87 = sphi 0, %s89
      %s90 = sphi 0, %s87
      %s91 = sphi 0, %s90
      %s107 = sphi 0, %s91
      %s113 = sphi 0, %s115
      %s116 = sphi 0, %s113
      %s117 = sphi 0, %s116
      %s133 = sphi 0, %s117
      %s141 = sphi 0, %s143
      %s144 = sphi 0, %s141
      %s145 = sphi 0, %s144
      %s161 = sphi 0, %s145
    $region4: #{tpu_custom_call.1} parent=1 // loop_header_branch
      %16 = sbr.rel (%p14) target = $region8
    $region5: #{tpu_custom_call.1} parent=1 // loop_body
      %s18 = ssub.s32 %s13, 1
      %s19 = ssub.s32 %s13, 2
      %s26 = sadd.s32 1, %s21
      %p27 = scmp.ge.s32.totalorder %s26, 4
      %s28 = scalar_select %p27, 0, %s26
      %s29 = sadd.s32 1, %s20
      %s30 = scalar_select %p27, %s29, %s20
      %p31 = scmp.ge.s32.totalorder %s30, 1
      %s32 = scalar_select %p31, 0, %s30
      %s33 = ssub.s32 %s21, %s28
      %p34 = scmp.eq.s32.totalorder %s33, 0
      %s36 = sadd.s32 %s35, 1
      %s37 = scalar_select %p34, %s35, %s36
      %p40 = pneg %p34
      %p41 = scmp.eq.s32.totalorder %s13, 3
      %p42 = por %p40, %p41
      %p43 = scmp.ne.s32.totalorder %s35, %s38
      %p44 = scmp.eq.s32.totalorder %s13, 0
      %p45 = por %p43, %p44
      %p46 = scmp.ne.s32.totalorder %s35, %s38
      %p47 = scmp.eq.s32.totalorder %s18, 3
      %p48 = por %p46, %p47
      %p49 = scmp.ne.s32.totalorder %s38, %s39
      %p50 = scmp.eq.s32.totalorder %s18, 0
      %p51 = por %p49, %p50
      %p52 = scmp.ne.s32.totalorder %s38, %s39
      %p53 = scmp.eq.s32.totalorder %s19, 3
      %p54 = por %p52, %p53
      %p56 = scmp.ne.s32.totalorder %s39, %s55
      %p57 = scmp.eq.s32.totalorder %s19, 0
      %p58 = por %p56, %p57
      %s59 = ssub.s32 %s20, %s32
      %p60 = scmp.eq.s32.totalorder %s59, 0
      %s62 = sadd.s32 %s61, 1
      %s63 = scalar_select %p60, %s61, %s62
      %p66 = pneg %p60
      %p67 = scmp.eq.s32.totalorder %s13, 3
      %p68 = por %p66, %p67
      %p69 = scmp.ne.s32.totalorder %s61, %s64
      %p70 = scmp.eq.s32.totalorder %s13, 0
      %p71 = por %p69, %p70
      %p72 = scmp.ne.s32.totalorder %s61, %s64
      %p73 = scmp.eq.s32.totalorder %s18, 3
      %p74 = por %p72, %p73
      %p75 = scmp.ne.s32.totalorder %s64, %s65
      %p76 = scmp.eq.s32.totalorder %s18, 0
      %p77 = por %p75, %p76
      %p78 = scmp.ne.s32.totalorder %s64, %s65
      %p79 = scmp.eq.s32.totalorder %s19, 3
      %p80 = por %p78, %p79
      %p82 = scmp.ne.s32.totalorder %s65, %s81
      %p83 = scmp.eq.s32.totalorder %s19, 0
      %p84 = por %p82, %p83
      %s85 = ssub.s32 %s20, %s32
      %p86 = scmp.eq.s32.totalorder %s85, 0
      %s88 = sadd.s32 %s87, 1
      %s89 = scalar_select %p86, %s87, %s88
      %p92 = pneg %p86
      %p93 = scmp.eq.s32.totalorder %s13, 3
      %p94 = por %p92, %p93
      %p95 = scmp.ne.s32.totalorder %s87, %s90
      %p96 = scmp.eq.s32.totalorder %s13, 0
      %p97 = por %p95, %p96
      %p98 = scmp.ne.s32.totalorder %s87, %s90
      %p99 = scmp.eq.s32.totalorder %s18, 3
      %p100 = por %p98, %p99
      %p101 = scmp.ne.s32.totalorder %s90, %s91
      %p102 = scmp.eq.s32.totalorder %s18, 0
      %p103 = por %p101, %p102
      %p104 = scmp.ne.s32.totalorder %s90, %s91
      %p105 = scmp.eq.s32.totalorder %s19, 3
      %p106 = por %p104, %p105
      %p108 = scmp.ne.s32.totalorder %s91, %s107
      %p109 = scmp.eq.s32.totalorder %s19, 0
      %p110 = por %p108, %p109
      %s111 = ssub.s32 %s20, %s32
      %p112 = scmp.eq.s32.totalorder %s111, 0
      %s114 = sadd.s32 %s113, 1
      %s115 = scalar_select %p112, %s113, %s114
      %p118 = pneg %p112
      %p119 = scmp.eq.s32.totalorder %s13, 3
      %p120 = por %p118, %p119
      %p121 = scmp.ne.s32.totalorder %s113, %s116
      %p122 = scmp.eq.s32.totalorder %s13, 0
      %p123 = por %p121, %p122
      %p124 = scmp.ne.s32.totalorder %s113, %s116
      %p125 = scmp.eq.s32.totalorder %s18, 3
      %p126 = por %p124, %p125
      %p127 = scmp.ne.s32.totalorder %s116, %s117
      %p128 = scmp.eq.s32.totalorder %s18, 0
      %p129 = por %p127, %p128
      %p130 = scmp.ne.s32.totalorder %s116, %s117
      %p131 = scmp.eq.s32.totalorder %s19, 3
      %p132 = por %p130, %p131
      %p134 = scmp.ne.s32.totalorder %s117, %s133
      %p135 = scmp.eq.s32.totalorder %s19, 0
      %p136 = por %p134, %p135
      %s137 = ssub.s32 %s21, %s28
      %s138 = ssub.s32 %s20, %s32
      %s139 = sor.u32 %s137, %s138
      %p140 = scmp.eq.s32.totalorder %s139, 0
      %s142 = sadd.s32 %s141, 1
      %s143 = scalar_select %p140, %s141, %s142
      %p146 = pneg %p140
      %p147 = scmp.eq.s32.totalorder %s13, 3
      %p148 = por %p146, %p147
      %p149 = scmp.ne.s32.totalorder %s141, %s144
      %p150 = scmp.eq.s32.totalorder %s13, 0
      %p151 = por %p149, %p150
      %p152 = scmp.ne.s32.totalorder %s141, %s144
      %p153 = scmp.eq.s32.totalorder %s18, 3
      %p154 = por %p152, %p153
      %p155 = scmp.ne.s32.totalorder %s144, %s145
      %p156 = scmp.eq.s32.totalorder %s18, 0
      %p157 = por %p155, %p156
      %p158 = scmp.ne.s32.totalorder %s144, %s145
      %p159 = scmp.eq.s32.totalorder %s19, 3
      %p160 = por %p158, %p159
      %p162 = scmp.ne.s32.totalorder %s145, %s161
      %p163 = scmp.eq.s32.totalorder %s19, 0
      %p164 = por %p162, %p163
      %p165 = scmp.le.s32.totalorder 1, %s13
      %p166 = scmp.lt.s32.totalorder %s13, 5
      %p167 = pnand %p165, %p166
      %p168 = pneg %p167
      // Predicated region
      $region9: #{tpu_custom_call.1} parent=5 // pred_check
        _
      $region10: #{tpu_custom_call.1} parent=5 // pred_check_branch
        %170 = sbr.rel (%p167) target = $region12
      $region11: #{tpu_custom_call.1} parent=5 // pred_region
        %s171 = ssub.s32 %s13, 1
        // Predicated region
        $region13: #{tpu_custom_call.1} parent=11 // pred_check
          %p172 = pneg %p77
        $region14: #{tpu_custom_call.1} parent=11 // pred_check_branch
          %174 = sbr.rel (%p172) target = $region16
        $region15: #{tpu_custom_call.1} parent=11 // pred_region
          %p175 = scmp.lt.s32.totalorder %s22, 0
          %s176 = scalar_select %p175, %s22, 0
          %s177 = smul.addr %s176, 4
          %s178 = scalar_lea.vmem %s1, %s177
        $region16: #{tpu_custom_call.1} parent=11 // pred_fallthru
          _
        // Predicated region
        $region17: #{tpu_custom_call.1} parent=11 // pred_check
          %p179 = pneg %p103
        $region18: #{tpu_custom_call.1} parent=11 // pred_check_branch
          %181 = sbr.rel (%p179) target = $region20
        $region19: #{tpu_custom_call.1} parent=11 // pred_region
          %p182 = scmp.lt.s32.totalorder %s22, 0
          %s183 = scalar_select %p182, %s22, 0
          %s184 = scalar_lea.vmem %s2, %s183
        $region20: #{tpu_custom_call.1} parent=11 // pred_fallthru
          _
        // Predicated region
        $region21: #{tpu_custom_call.1} parent=11 // pred_check
          %p185 = pneg %p129
        $region22: #{tpu_custom_call.1} parent=11 // pred_check_branch
          %187 = sbr.rel (%p185) target = $region24
        $region23: #{tpu_custom_call.1} parent=11 // pred_region
          %p188 = scmp.lt.s32.totalorder %s22, 0
          %s189 = scalar_select %p188, %s22, 0
          %s190 = scalar_lea.vmem %s3, %s189
        $region24: #{tpu_custom_call.1} parent=11 // pred_fallthru
          _
      $region12: #{tpu_custom_call.1} parent=5 // pred_fallthru
        _
      %p191 = scmp.lt.s32.totalorder %s13, 4
      // Predicated region
      $region25: #{tpu_custom_call.1} parent=5 // pred_check
        %p192 = pneg %p191
      $region26: #{tpu_custom_call.1} parent=5 // pred_check_branch
        %194 = sbr.rel (%p192) target = $region28
      $region27: #{tpu_custom_call.1} parent=5 // pred_region
        // Predicated region
        $region29: #{tpu_custom_call.1} parent=27 // pred_check
          %p195 = pneg %p45
        $region30: #{tpu_custom_call.1} parent=27 // pred_check_branch
          %197 = sbr.rel (%p195) target = $region32
        $region31: #{tpu_custom_call.1} parent=27 // pred_region
          %s198 = smul.u32 64, %s21
          %p199 = scmp.lt.s32.totalorder %s198, 255
          %s200 = scalar_select %p199, %s198, 255
          %s201 = smul.addr %s200, 4
          %s202 = smul.addr %s201, 4
          %s203 = scalar_lea.vmem %s0, %s202
          %s204 = smul.u32 64, %s21
        $region32: #{tpu_custom_call.1} parent=27 // pred_fallthru
          _
      $region28: #{tpu_custom_call.1} parent=5 // pred_fallthru
        _
      %p205 = scmp.le.s32.totalorder 1, %s13
      %p206 = scmp.lt.s32.totalorder %s13, 5
      %p207 = pnand %p205, %p206
      %p208 = pneg %p207
      // Predicated region
      $region33: #{tpu_custom_call.1} parent=5 // pred_check
        _
      $region34: #{tpu_custom_call.1} parent=5 // pred_check_branch
        %210 = sbr.rel (%p207) target = $region36
      $region35: #{tpu_custom_call.1} parent=5 // pred_region
        %s211 = ssub.s32 %s13, 1
        %s212 = smul.u32 64, %s23
        %p213 = scmp.lt.s32.totalorder %s212, 255
        %s214 = scalar_select %p213, %s212, 255
        %s215 = smul.addr %s214, 4
        %s216 = smul.addr %s215, 4
        %s217 = scalar_lea.vmem %s0, %s216
        %p218 = pneg %p51
        %p219 = pneg %p48
        %p220 = scmp.lt.s32.totalorder %s22, 0
        %s221 = scalar_select %p220, %s22, 0
        %s222 = smul.addr %s221, 4
        %s223 = scalar_lea.vmem %s1, %s222
        %p224 = pneg %p77
        %p225 = pneg %p74
        %p226 = scmp.lt.s32.totalorder %s22, 0
        %s227 = scalar_select %p226, %s22, 0
        %s228 = scalar_lea.vmem %s2, %s227
        %p229 = pneg %p103
        %p230 = pneg %p100
        %p231 = scmp.lt.s32.totalorder %s22, 0
        %s232 = scalar_select %p231, %s22, 0
        %s233 = scalar_lea.vmem %s3, %s232
        %p234 = pneg %p129
        %p235 = pneg %p126
        %p236 = pneg %p157
        %p237 = pneg %p154
        %s238 = sand.u32 %s144, 1
        %s239 = scalar_lea.sflag [#allocation3], %s238
        %s240 = sand.u32 %s144, 1
        %s241 = smul.addr %s240, 256
        %s242 = scalar_lea.vmem [#allocation2], %s241
        %s243 = smul.u32 64, %s23
        %p244 = scmp.lt.s32.totalorder %s243, 255
        %s245 = scalar_select %p244, %s243, 255
        %s246 = smul.addr %s245, 4
        %s247 = smul.addr %s246, 4
        %s248 = scalar_lea.vmem %s0, %s247
        %s249 = smul.u32 64, %s23
        %p250 = scmp.lt.s32.totalorder %s22, 0
        %s251 = scalar_select %p250, %s22, 0
        %s252 = smul.addr %s251, 4
        %s253 = scalar_lea.vmem %s1, %s252
        %p254 = scmp.lt.s32.totalorder %s22, 0
        %s255 = scalar_select %p254, %s22, 0
        %s256 = scalar_lea.vmem %s2, %s255
        %p257 = scmp.lt.s32.totalorder %s22, 0
        %s258 = scalar_select %p257, %s22, 0
        %s259 = scalar_lea.vmem %s3, %s258
        %s260 = smul.u32 64, %s23
        %v262 = vld [vmem:[%s248] sm:$0xff]
        %v263 = vld [vmem:[%s248 + $0x8] sm:$0xff]
        %v264 = vld [vmem:[%s248 + $0x10] sm:$0xff]
        %v265 = vld [vmem:[%s248 + $0x18] sm:$0xff]
        %v266 = vld [vmem:[%s248 + $0x20] sm:$0xff]
        %v267 = vld [vmem:[%s248 + $0x28] sm:$0xff]
        %v268 = vld [vmem:[%s248 + $0x30] sm:$0xff]
        %v269 = vld [vmem:[%s248 + $0x38] sm:$0xff]
        %v270 = vld [vmem:[%s248 + $0x40] sm:$0xff]
        %v271 = vld [vmem:[%s248 + $0x48] sm:$0xff]
        %v272 = vld [vmem:[%s248 + $0x50] sm:$0xff]
        %v273 = vld [vmem:[%s248 + $0x58] sm:$0xff]
        %v274 = vld [vmem:[%s248 + $0x60] sm:$0xff]
        %v275 = vld [vmem:[%s248 + $0x68] sm:$0xff]
        %v276 = vld [vmem:[%s248 + $0x70] sm:$0xff]
        %v277 = vld [vmem:[%s248 + $0x78] sm:$0xff]
        %v278 = vld [vmem:[%s248 + $0x80] sm:$0xff]
        %v279 = vld [vmem:[%s248 + $0x88] sm:$0xff]
        %v280 = vld [vmem:[%s248 + $0x90] sm:$0xff]
        %v281 = vld [vmem:[%s248 + $0x98] sm:$0xff]
        %v282 = vld [vmem:[%s248 + $0xa0] sm:$0xff]
        %v283 = vld [vmem:[%s248 + $0xa8] sm:$0xff]
        %v284 = vld [vmem:[%s248 + $0xb0] sm:$0xff]
        %v285 = vld [vmem:[%s248 + $0xb8] sm:$0xff]
        %v286 = vld [vmem:[%s248 + $0xc0] sm:$0xff]
        %v287 = vld [vmem:[%s248 + $0xc8] sm:$0xff]
        %v288 = vld [vmem:[%s248 + $0xd0] sm:$0xff]
        %v289 = vld [vmem:[%s248 + $0xd8] sm:$0xff]
        %v290 = vld [vmem:[%s248 + $0xe0] sm:$0xff]
        %v291 = vld [vmem:[%s248 + $0xe8] sm:$0xff]
        %v292 = vld [vmem:[%s248 + $0xf0] sm:$0xff]
        %v293 = vld [vmem:[%s248 + $0xf8] sm:$0xff]
        %v294 = vld [vmem:[%s248 + $0x100] sm:$0xff]
        %v295 = vld [vmem:[%s248 + $0x108] sm:$0xff]
        %v296 = vld [vmem:[%s248 + $0x110] sm:$0xff]
        %v297 = vld [vmem:[%s248 + $0x118] sm:$0xff]
        %v298 = vld [vmem:[%s248 + $0x120] sm:$0xff]
        %v299 = vld [vmem:[%s248 + $0x128] sm:$0xff]
        %v300 = vld [vmem:[%s248 + $0x130] sm:$0xff]
        %v301 = vld [vmem:[%s248 + $0x138] sm:$0xff]
        %v302 = vld [vmem:[%s248 + $0x140] sm:$0xff]
        %v303 = vld [vmem:[%s248 + $0x148] sm:$0xff]
        %v304 = vld [vmem:[%s248 + $0x150] sm:$0xff]
        %v305 = vld [vmem:[%s248 + $0x158] sm:$0xff]
        %v306 = vld [vmem:[%s248 + $0x160] sm:$0xff]
        %v307 = vld [vmem:[%s248 + $0x168] sm:$0xff]
        %v308 = vld [vmem:[%s248 + $0x170] sm:$0xff]
        %v309 = vld [vmem:[%s248 + $0x178] sm:$0xff]
        %v310 = vld [vmem:[%s248 + $0x180] sm:$0xff]
        %v311 = vld [vmem:[%s248 + $0x188] sm:$0xff]
        %v312 = vld [vmem:[%s248 + $0x190] sm:$0xff]
        %v313 = vld [vmem:[%s248 + $0x198] sm:$0xff]
        %v314 = vld [vmem:[%s248 + $0x1a0] sm:$0xff]
        %v315 = vld [vmem:[%s248 + $0x1a8] sm:$0xff]
        %v316 = vld [vmem:[%s248 + $0x1b0] sm:$0xff]
        %v317 = vld [vmem:[%s248 + $0x1b8] sm:$0xff]
        %v318 = vld [vmem:[%s248 + $0x1c0] sm:$0xff]
        %v319 = vld [vmem:[%s248 + $0x1c8] sm:$0xff]
        %v320 = vld [vmem:[%s248 + $0x1d0] sm:$0xff]
        %v321 = vld [vmem:[%s248 + $0x1d8] sm:$0xff]
        %v322 = vld [vmem:[%s248 + $0x1e0] sm:$0xff]
        %v323 = vld [vmem:[%s248 + $0x1e8] sm:$0xff]
        %v324 = vld [vmem:[%s248 + $0x1f0] sm:$0xff]
        %v325 = vld [vmem:[%s248 + $0x1f8] sm:$0xff]
        %v326 = vld [vmem:[%s248 + $0x200] sm:$0xff]
        %v327 = vld [vmem:[%s248 + $0x208] sm:$0xff]
        %v328 = vld [vmem:[%s248 + $0x210] sm:$0xff]
        %v329 = vld [vmem:[%s248 + $0x218] sm:$0xff]
        %v330 = vld [vmem:[%s248 + $0x220] sm:$0xff]
        %v331 = vld [vmem:[%s248 + $0x228] sm:$0xff]
        %v332 = vld [vmem:[%s248 + $0x230] sm:$0xff]
        %v333 = vld [vmem:[%s248 + $0x238] sm:$0xff]
        %v334 = vld [vmem:[%s248 + $0x240] sm:$0xff]
        %v335 = vld [vmem:[%s248 + $0x248] sm:$0xff]
        %v336 = vld [vmem:[%s248 + $0x250] sm:$0xff]
        %v337 = vld [vmem:[%s248 + $0x258] sm:$0xff]
        %v338 = vld [vmem:[%s248 + $0x260] sm:$0xff]
        %v339 = vld [vmem:[%s248 + $0x268] sm:$0xff]
        %v340 = vld [vmem:[%s248 + $0x270] sm:$0xff]
        %v341 = vld [vmem:[%s248 + $0x278] sm:$0xff]
        %v342 = vld [vmem:[%s248 + $0x280] sm:$0xff]
        %v343 = vld [vmem:[%s248 + $0x288] sm:$0xff]
        %v344 = vld [vmem:[%s248 + $0x290] sm:$0xff]
        %v345 = vld [vmem:[%s248 + $0x298] sm:$0xff]
        %v346 = vld [vmem:[%s248 + $0x2a0] sm:$0xff]
        %v347 = vld [vmem:[%s248 + $0x2a8] sm:$0xff]
        %v348 = vld [vmem:[%s248 + $0x2b0] sm:$0xff]
        %v349 = vld [vmem:[%s248 + $0x2b8] sm:$0xff]
        %v350 = vld [vmem:[%s248 + $0x2c0] sm:$0xff]
        %v351 = vld [vmem:[%s248 + $0x2c8] sm:$0xff]
        %v352 = vld [vmem:[%s248 + $0x2d0] sm:$0xff]
        %v353 = vld [vmem:[%s248 + $0x2d8] sm:$0xff]
        %v354 = vld [vmem:[%s248 + $0x2e0] sm:$0xff]
        %v355 = vld [vmem:[%s248 + $0x2e8] sm:$0xff]
        %v356 = vld [vmem:[%s248 + $0x2f0] sm:$0xff]
        %v357 = vld [vmem:[%s248 + $0x2f8] sm:$0xff]
        %v358 = vld [vmem:[%s248 + $0x300] sm:$0xff]
        %v359 = vld [vmem:[%s248 + $0x308] sm:$0xff]
        %v360 = vld [vmem:[%s248 + $0x310] sm:$0xff]
        %v361 = vld [vmem:[%s248 + $0x318] sm:$0xff]
        %v362 = vld [vmem:[%s248 + $0x320] sm:$0xff]
        %v363 = vld [vmem:[%s248 + $0x328] sm:$0xff]
        %v364 = vld [vmem:[%s248 + $0x330] sm:$0xff]
        %v365 = vld [vmem:[%s248 + $0x338] sm:$0xff]
        %v366 = vld [vmem:[%s248 + $0x340] sm:$0xff]
        %v367 = vld [vmem:[%s248 + $0x348] sm:$0xff]
        %v368 = vld [vmem:[%s248 + $0x350] sm:$0xff]
        %v369 = vld [vmem:[%s248 + $0x358] sm:$0xff]
        %v370 = vld [vmem:[%s248 + $0x360] sm:$0xff]
        %v371 = vld [vmem:[%s248 + $0x368] sm:$0xff]
        %v372 = vld [vmem:[%s248 + $0x370] sm:$0xff]
        %v373 = vld [vmem:[%s248 + $0x378] sm:$0xff]
        %v374 = vld [vmem:[%s248 + $0x380] sm:$0xff]
        %v375 = vld [vmem:[%s248 + $0x388] sm:$0xff]
        %v376 = vld [vmem:[%s248 + $0x390] sm:$0xff]
        %v377 = vld [vmem:[%s248 + $0x398] sm:$0xff]
        %v378 = vld [vmem:[%s248 + $0x3a0] sm:$0xff]
        %v379 = vld [vmem:[%s248 + $0x3a8] sm:$0xff]
        %v380 = vld [vmem:[%s248 + $0x3b0] sm:$0xff]
        %v381 = vld [vmem:[%s248 + $0x3b8] sm:$0xff]
        %v382 = vld [vmem:[%s248 + $0x3c0] sm:$0xff]
        %v383 = vld [vmem:[%s248 + $0x3c8] sm:$0xff]
        %v384 = vld [vmem:[%s248 + $0x3d0] sm:$0xff]
        %v385 = vld [vmem:[%s248 + $0x3d8] sm:$0xff]
        %v386 = vld [vmem:[%s248 + $0x3e0] sm:$0xff]
        %v387 = vld [vmem:[%s248 + $0x3e8] sm:$0xff]
        %v388 = vld [vmem:[%s248 + $0x3f0] sm:$0xff]
        %v389 = vld [vmem:[%s248 + $0x3f8] sm:$0xff]
        %v390 = vld [vmem:[%s253] sm:$0xf]
        %v391 = vld [vmem:[%s253 + $0x4] sm:$0xf]
        %v392 = vld [vmem:[%s253 + $0x8] sm:$0xf]
        %v393 = vld [vmem:[%s253 + $0xc] sm:$0xf]
        %v394 = vld [vmem:[%s253 + $0x10] sm:$0xf]
        %v395 = vld [vmem:[%s253 + $0x14] sm:$0xf]
        %v396 = vld [vmem:[%s253 + $0x18] sm:$0xf]
        %v397 = vld [vmem:[%s253 + $0x1c] sm:$0xf]
        %v398 = vld [vmem:[%s253 + $0x20] sm:$0xf]
        %v399 = vld [vmem:[%s253 + $0x24] sm:$0xf]
        %v400 = vld [vmem:[%s253 + $0x28] sm:$0xf]
        %v401 = vld [vmem:[%s253 + $0x2c] sm:$0xf]
        %v402 = vld [vmem:[%s253 + $0x30] sm:$0xf]
        %v403 = vld [vmem:[%s253 + $0x34] sm:$0xf]
        %v404 = vld [vmem:[%s253 + $0x38] sm:$0xf]
        %v405 = vld [vmem:[%s253 + $0x3c] sm:$0xf]
        %v406 = vld [vmem:[%s253 + $0x40] sm:$0xf]
        %v407 = vld [vmem:[%s253 + $0x44] sm:$0xf]
        %v408 = vld [vmem:[%s253 + $0x48] sm:$0xf]
        %v409 = vld [vmem:[%s253 + $0x4c] sm:$0xf]
        %v410 = vld [vmem:[%s253 + $0x50] sm:$0xf]
        %v411 = vld [vmem:[%s253 + $0x54] sm:$0xf]
        %v412 = vld [vmem:[%s253 + $0x58] sm:$0xf]
        %v413 = vld [vmem:[%s253 + $0x5c] sm:$0xf]
        %v414 = vld [vmem:[%s253 + $0x60] sm:$0xf]
        %v415 = vld [vmem:[%s253 + $0x64] sm:$0xf]
        %v416 = vld [vmem:[%s253 + $0x68] sm:$0xf]
        %v417 = vld [vmem:[%s253 + $0x6c] sm:$0xf]
        %v418 = vld [vmem:[%s253 + $0x70] sm:$0xf]
        %v419 = vld [vmem:[%s253 + $0x74] sm:$0xf]
        %v420 = vld [vmem:[%s253 + $0x78] sm:$0xf]
        %v421 = vld [vmem:[%s253 + $0x7c] sm:$0xf]
        %v422 = vld [vmem:[%s253 + $0x80] sm:$0xf]
        %v423 = vld [vmem:[%s253 + $0x84] sm:$0xf]
        %v424 = vld [vmem:[%s253 + $0x88] sm:$0xf]
        %v425 = vld [vmem:[%s253 + $0x8c] sm:$0xf]
        %v426 = vld [vmem:[%s253 + $0x90] sm:$0xf]
        %v427 = vld [vmem:[%s253 + $0x94] sm:$0xf]
        %v428 = vld [vmem:[%s253 + $0x98] sm:$0xf]
        %v429 = vld [vmem:[%s253 + $0x9c] sm:$0xf]
        %v430 = vld [vmem:[%s253 + $0xa0] sm:$0xf]
        %v431 = vld [vmem:[%s253 + $0xa4] sm:$0xf]
        %v432 = vld [vmem:[%s253 + $0xa8] sm:$0xf]
        %v433 = vld [vmem:[%s253 + $0xac] sm:$0xf]
        %v434 = vld [vmem:[%s253 + $0xb0] sm:$0xf]
        %v435 = vld [vmem:[%s253 + $0xb4] sm:$0xf]
        %v436 = vld [vmem:[%s253 + $0xb8] sm:$0xf]
        %v437 = vld [vmem:[%s253 + $0xbc] sm:$0xf]
        %v438 = vld [vmem:[%s253 + $0xc0] sm:$0xf]
        %v567 = vunpack.c.l.b16 %v262
        %v568 = vunpack.c.h.b16 %v262
        %v569 = vunpack.c.l.b16 %v263
        %v570 = vunpack.c.h.b16 %v263
        %v571 = vunpack.c.l.b16 %v264
        %v572 = vunpack.c.h.b16 %v264
        %v573 = vunpack.c.l.b16 %v265
        %v574 = vunpack.c.h.b16 %v265
        %v575 = vunpack.c.l.b16 %v266
        %v576 = vunpack.c.h.b16 %v266
        %v577 = vunpack.c.l.b16 %v267
        %v578 = vunpack.c.h.b16 %v267
        %v579 = vunpack.c.l.b16 %v268
        %v580 = vunpack.c.h.b16 %v268
        %v581 = vunpack.c.l.b16 %v269
        %v582 = vunpack.c.h.b16 %v269
        %v583 = vunpack.c.l.b16 %v270
        %v584 = vunpack.c.h.b16 %v270
        %v585 = vunpack.c.l.b16 %v271
        %v586 = vunpack.c.h.b16 %v271
        %v587 = vunpack.c.l.b16 %v272
        %v588 = vunpack.c.h.b16 %v272
        %v589 = vunpack.c.l.b16 %v273
        %v590 = vunpack.c.h.b16 %v273
        %v591 = vunpack.c.l.b16 %v274
        %v592 = vunpack.c.h.b16 %v274
        %v593 = vunpack.c.l.b16 %v275
        %v594 = vunpack.c.h.b16 %v275
        %v595 = vunpack.c.l.b16 %v276
        %v596 = vunpack.c.h.b16 %v276
        %v597 = vunpack.c.l.b16 %v277
        %v598 = vunpack.c.h.b16 %v277
        %v599 = vunpack.c.l.b16 %v278
        %v600 = vunpack.c.h.b16 %v278
        %v601 = vunpack.c.l.b16 %v279
        %v602 = vunpack.c.h.b16 %v279
        %v603 = vunpack.c.l.b16 %v280
        %v604 = vunpack.c.h.b16 %v280
        %v605 = vunpack.c.l.b16 %v281
        %v606 = vunpack.c.h.b16 %v281
        %v607 = vunpack.c.l.b16 %v282
        %v608 = vunpack.c.h.b16 %v282
        %v609 = vunpack.c.l.b16 %v283
        %v610 = vunpack.c.h.b16 %v283
        %v611 = vunpack.c.l.b16 %v284
        %v612 = vunpack.c.h.b16 %v284
        %v613 = vunpack.c.l.b16 %v285
        %v614 = vunpack.c.h.b16 %v285
        %v615 = vunpack.c.l.b16 %v286
        %v616 = vunpack.c.h.b16 %v286
        %v617 = vunpack.c.l.b16 %v287
        %v618 = vunpack.c.h.b16 %v287
        %v619 = vunpack.c.l.b16 %v288
        %v620 = vunpack.c.h.b16 %v288
        %v621 = vunpack.c.l.b16 %v289
        %v622 = vunpack.c.h.b16 %v289
        %v623 = vunpack.c.l.b16 %v290
        %v624 = vunpack.c.h.b16 %v290
        %v625 = vunpack.c.l.b16 %v291
        %v626 = vunpack.c.h.b16 %v291
        %v627 = vunpack.c.l.b16 %v292
        %v628 = vunpack.c.h.b16 %v292
        %v629 = vunpack.c.l.b16 %v293
        %v630 = vunpack.c.h.b16 %v293
        %v631 = vunpack.c.l.b16 %v294
        %v632 = vunpack.c.h.b16 %v294
        %v633 = vunpack.c.l.b16 %v295
        %v634 = vunpack.c.h.b16 %v295
        %v635 = vunpack.c.l.b16 %v296
        %v636 = vunpack.c.h.b16 %v296
        %v637 = vunpack.c.l.b16 %v297
        %v638 = vunpack.c.h.b16 %v297
        %v639 = vunpack.c.l.b16 %v298
        %v640 = vunpack.c.h.b16 %v298
        %v641 = vunpack.c.l.b16 %v299
        %v642 = vunpack.c.h.b16 %v299
        %v643 = vunpack.c.l.b16 %v300
        %v644 = vunpack.c.h.b16 %v300
        %v645 = vunpack.c.l.b16 %v301
        %v646 = vunpack.c.h.b16 %v301
        %v647 = vunpack.c.l.b16 %v302
        %v648 = vunpack.c.h.b16 %v302
        %v649 = vunpack.c.l.b16 %v303
        %v650 = vunpack.c.h.b16 %v303
        %v651 = vunpack.c.l.b16 %v304
        %v652 = vunpack.c.h.b16 %v304
        %v653 = vunpack.c.l.b16 %v305
        %v654 = vunpack.c.h.b16 %v305
        %v655 = vunpack.c.l.b16 %v306
        %v656 = vunpack.c.h.b16 %v306
        %v657 = vunpack.c.l.b16 %v307
        %v658 = vunpack.c.h.b16 %v307
        %v659 = vunpack.c.l.b16 %v308
        %v660 = vunpack.c.h.b16 %v308
        %v661 = vunpack.c.l.b16 %v309
        %v662 = vunpack.c.h.b16 %v309
        %v663 = vunpack.c.l.b16 %v310
        %v664 = vunpack.c.h.b16 %v310
        %v665 = vunpack.c.l.b16 %v311
        %v666 = vunpack.c.h.b16 %v311
        %v667 = vunpack.c.l.b16 %v312
        %v668 = vunpack.c.h.b16 %v312
        %v669 = vunpack.c.l.b16 %v313
        %v670 = vunpack.c.h.b16 %v313
        %v671 = vunpack.c.l.b16 %v314
        %v672 = vunpack.c.h.b16 %v314
        %v673 = vunpack.c.l.b16 %v315
        %v674 = vunpack.c.h.b16 %v315
        %v675 = vunpack.c.l.b16 %v316
        %v676 = vunpack.c.h.b16 %v316
        %v677 = vunpack.c.l.b16 %v317
        %v678 = vunpack.c.h.b16 %v317
        %v679 = vunpack.c.l.b16 %v318
        %v680 = vunpack.c.h.b16 %v318
        %v681 = vunpack.c.l.b16 %v319
        %v682 = vunpack.c.h.b16 %v319
        %v683 = vunpack.c.l.b16 %v320
        %v684 = vunpack.c.h.b16 %v320
        %v685 = vunpack.c.l.b16 %v321
        %v686 = vunpack.c.h.b16 %v321
        %v687 = vunpack.c.l.b16 %v322
        %v688 = vunpack.c.h.b16 %v322
        %v689 = vunpack.c.l.b16 %v323
        %v690 = vunpack.c.h.b16 %v323
        %v691 = vunpack.c.l.b16 %v324
        %v692 = vunpack.c.h.b16 %v324
        %v693 = vunpack.c.l.b16 %v325
        %v694 = vunpack.c.h.b16 %v325
        %v695 = vunpack.c.l.b16 %v326
        %v696 = vunpack.c.h.b16 %v326
        %v697 = vunpack.c.l.b16 %v327
        %v698 = vunpack.c.h.b16 %v327
        %v699 = vunpack.c.l.b16 %v328
        %v700 = vunpack.c.h.b16 %v328
        %v701 = vunpack.c.l.b16 %v329
        %v702 = vunpack.c.h.b16 %v329
        %v703 = vunpack.c.l.b16 %v330
        %v704 = vunpack.c.h.b16 %v330
        %v705 = vunpack.c.l.b16 %v331
        %v706 = vunpack.c.h.b16 %v331
        %v707 = vunpack.c.l.b16 %v332
        %v708 = vunpack.c.h.b16 %v332
        %v709 = vunpack.c.l.b16 %v333
        %v710 = vunpack.c.h.b16 %v333
        %v711 = vunpack.c.l.b16 %v334
        %v712 = vunpack.c.h.b16 %v334
        %v713 = vunpack.c.l.b16 %v335
        %v714 = vunpack.c.h.b16 %v335
        %v715 = vunpack.c.l.b16 %v336
        %v716 = vunpack.c.h.b16 %v336
        %v717 = vunpack.c.l.b16 %v337
        %v718 = vunpack.c.h.b16 %v337
        %v719 = vunpack.c.l.b16 %v338
        %v720 = vunpack.c.h.b16 %v338
        %v721 = vunpack.c.l.b16 %v339
        %v722 = vunpack.c.h.b16 %v339
        %v723 = vunpack.c.l.b16 %v340
        %v724 = vunpack.c.h.b16 %v340
        %v725 = vunpack.c.l.b16 %v341
        %v726 = vunpack.c.h.b16 %v341
        %v727 = vunpack.c.l.b16 %v342
        %v728 = vunpack.c.h.b16 %v342
        %v729 = vunpack.c.l.b16 %v343
        %v730 = vunpack.c.h.b16 %v343
        %v731 = vunpack.c.l.b16 %v344
        %v732 = vunpack.c.h.b16 %v344
        %v733 = vunpack.c.l.b16 %v345
        %v734 = vunpack.c.h.b16 %v345
        %v735 = vunpack.c.l.b16 %v346
        %v736 = vunpack.c.h.b16 %v346
        %v737 = vunpack.c.l.b16 %v347
        %v738 = vunpack.c.h.b16 %v347
        %v739 = vunpack.c.l.b16 %v348
        %v740 = vunpack.c.h.b16 %v348
        %v741 = vunpack.c.l.b16 %v349
        %v742 = vunpack.c.h.b16 %v349
        %v743 = vunpack.c.l.b16 %v350
        %v744 = vunpack.c.h.b16 %v350
        %v745 = vunpack.c.l.b16 %v351
        %v746 = vunpack.c.h.b16 %v351
        %v747 = vunpack.c.l.b16 %v352
        %v748 = vunpack.c.h.b16 %v352
        %v749 = vunpack.c.l.b16 %v353
        %v750 = vunpack.c.h.b16 %v353
        %v751 = vunpack.c.l.b16 %v354
        %v752 = vunpack.c.h.b16 %v354
        %v753 = vunpack.c.l.b16 %v355
        %v754 = vunpack.c.h.b16 %v355
        %v755 = vunpack.c.l.b16 %v356
        %v756 = vunpack.c.h.b16 %v356
        %v757 = vunpack.c.l.b16 %v357
        %v758 = vunpack.c.h.b16 %v357
        %v759 = vunpack.c.l.b16 %v358
        %v760 = vunpack.c.h.b16 %v358
        %v761 = vunpack.c.l.b16 %v359
        %v762 = vunpack.c.h.b16 %v359
        %v763 = vunpack.c.l.b16 %v360
        %v764 = vunpack.c.h.b16 %v360
        %v765 = vunpack.c.l.b16 %v361
        %v766 = vunpack.c.h.b16 %v361
        %v767 = vunpack.c.l.b16 %v362
        %v768 = vunpack.c.h.b16 %v362
        %v769 = vunpack.c.l.b16 %v363
        %v770 = vunpack.c.h.b16 %v363
        %v771 = vunpack.c.l.b16 %v364
        %v772 = vunpack.c.h.b16 %v364
        %v773 = vunpack.c.l.b16 %v365
        %v774 = vunpack.c.h.b16 %v365
        %v775 = vunpack.c.l.b16 %v366
        %v776 = vunpack.c.h.b16 %v366
        %v777 = vunpack.c.l.b16 %v367
        %v778 = vunpack.c.h.b16 %v367
        %v779 = vunpack.c.l.b16 %v368
        %v780 = vunpack.c.h.b16 %v368
        %v781 = vunpack.c.l.b16 %v369
        %v782 = vunpack.c.h.b16 %v369
        %v783 = vunpack.c.l.b16 %v370
        %v784 = vunpack.c.h.b16 %v370
        %v785 = vunpack.c.l.b16 %v371
        %v786 = vunpack.c.h.b16 %v371
        %v787 = vunpack.c.l.b16 %v372
        %v788 = vunpack.c.h.b16 %v372
        %v789 = vunpack.c.l.b16 %v373
        %v790 = vunpack.c.h.b16 %v373
        %v791 = vunpack.c.l.b16 %v374
        %v792 = vunpack.c.h.b16 %v374
        %v793 = vunpack.c.l.b16 %v375
        %v794 = vunpack.c.h.b16 %v375
        %v795 = vunpack.c.l.b16 %v376
        %v796 = vunpack.c.h.b16 %v376
        %v797 = vunpack.c.l.b16 %v377
        %v798 = vunpack.c.h.b16 %v377
        %v799 = vunpack.c.l.b16 %v378
        %v800 = vunpack.c.h.b16 %v378
        %v801 = vunpack.c.l.b16 %v379
        %v802 = vunpack.c.h.b16 %v379
        %v803 = vunpack.c.l.b16 %v380
        %v804 = vunpack.c.h.b16 %v380
        %v805 = vunpack.c.l.b16 %v381
        %v806 = vunpack.c.h.b16 %v381
        %v807 = vunpack.c.l.b16 %v382
        %v808 = vunpack.c.h.b16 %v382
        %v809 = vunpack.c.l.b16 %v383
        %v810 = vunpack.c.h.b16 %v383
        %v811 = vunpack.c.l.b16 %v384
        %v812 = vunpack.c.h.b16 %v384
        %v813 = vunpack.c.l.b16 %v385
        %v814 = vunpack.c.h.b16 %v385
        %v815 = vunpack.c.l.b16 %v386
        %v816 = vunpack.c.h.b16 %v386
        %v817 = vunpack.c.l.b16 %v387
        %v818 = vunpack.c.h.b16 %v387
        %v819 = vunpack.c.l.b16 %v388
        %v820 = vunpack.c.h.b16 %v388
        %v821 = vunpack.c.l.b16 %v389
        %v822 = vunpack.c.h.b16 %v389
        %v823 = vpack.c.b16 %v571, %v567
        %v824 = vpack.c.b16 %v572, %v568
        %v825 = vpack.c.b16 %v573, %v569
        %v826 = vpack.c.b16 %v574, %v570
        %v827 = vpack.c.b16 %v579, %v575
        %v828 = vpack.c.b16 %v580, %v576
        %v829 = vpack.c.b16 %v581, %v577
        %v830 = vpack.c.b16 %v582, %v578
        %v831 = vpack.c.b16 %v587, %v583
        %v832 = vpack.c.b16 %v588, %v584
        %v833 = vpack.c.b16 %v589, %v585
        %v834 = vpack.c.b16 %v590, %v586
        %v835 = vpack.c.b16 %v595, %v591
        %v836 = vpack.c.b16 %v596, %v592
        %v837 = vpack.c.b16 %v597, %v593
        %v838 = vpack.c.b16 %v598, %v594
        %v839 = vpack.c.b16 %v603, %v599
        %v840 = vpack.c.b16 %v604, %v600
        %v841 = vpack.c.b16 %v605, %v601
        %v842 = vpack.c.b16 %v606, %v602
        %v843 = vpack.c.b16 %v611, %v607
        %v844 = vpack.c.b16 %v612, %v608
        %v845 = vpack.c.b16 %v613, %v609
        %v846 = vpack.c.b16 %v614, %v610
        %v847 = vpack.c.b16 %v619, %v615
        %v848 = vpack.c.b16 %v620, %v616
        %v849 = vpack.c.b16 %v621, %v617
        %v850 = vpack.c.b16 %v622, %v618
        %v851 = vpack.c.b16 %v627, %v623
        %v852 = vpack.c.b16 %v628, %v624
        %v853 = vpack.c.b16 %v629, %v625
        %v854 = vpack.c.b16 %v630, %v626
        %v855 = vpack.c.b16 %v635, %v631
        %v856 = vpack.c.b16 %v636, %v632
        %v857 = vpack.c.b16 %v637, %v633
        %v858 = vpack.c.b16 %v638, %v634
        %v859 = vpack.c.b16 %v643, %v639
        %v860 = vpack.c.b16 %v644, %v640
        %v861 = vpack.c.b16 %v645, %v641
        %v862 = vpack.c.b16 %v646, %v642
        %v863 = vpack.c.b16 %v651, %v647
        %v864 = vpack.c.b16 %v652, %v648
        %v865 = vpack.c.b16 %v653, %v649
        %v866 = vpack.c.b16 %v654, %v650
        %v867 = vpack.c.b16 %v659, %v655
        %v868 = vpack.c.b16 %v660, %v656
        %v869 = vpack.c.b16 %v661, %v657
        %v870 = vpack.c.b16 %v662, %v658
        %v871 = vpack.c.b16 %v667, %v663
        %v872 = vpack.c.b16 %v668, %v664
        %v873 = vpack.c.b16 %v669, %v665
        %v874 = vpack.c.b16 %v670, %v666
        %v875 = vpack.c.b16 %v675, %v671
        %v876 = vpack.c.b16 %v676, %v672
        %v877 = vpack.c.b16 %v677, %v673
        %v878 = vpack.c.b16 %v678, %v674
        %v879 = vpack.c.b16 %v683, %v679
        %v880 = vpack.c.b16 %v684, %v680
        %v881 = vpack.c.b16 %v685, %v681
        %v882 = vpack.c.b16 %v686, %v682
        %v883 = vpack.c.b16 %v691, %v687
        %v884 = vpack.c.b16 %v692, %v688
        %v885 = vpack.c.b16 %v693, %v689
        %v886 = vpack.c.b16 %v694, %v690
        %v887 = vpack.c.b16 %v699, %v695
        %v888 = vpack.c.b16 %v700, %v696
        %v889 = vpack.c.b16 %v701, %v697
        %v890 = vpack.c.b16 %v702, %v698
        %v891 = vpack.c.b16 %v707, %v703
        %v892 = vpack.c.b16 %v708, %v704
        %v893 = vpack.c.b16 %v709, %v705
        %v894 = vpack.c.b16 %v710, %v706
        %v895 = vpack.c.b16 %v715, %v711
        %v896 = vpack.c.b16 %v716, %v712
        %v897 = vpack.c.b16 %v717, %v713
        %v898 = vpack.c.b16 %v718, %v714
        %v899 = vpack.c.b16 %v723, %v719
        %v900 = vpack.c.b16 %v724, %v720
        %v901 = vpack.c.b16 %v725, %v721
        %v902 = vpack.c.b16 %v726, %v722
        %v903 = vpack.c.b16 %v731, %v727
        %v904 = vpack.c.b16 %v732, %v728
        %v905 = vpack.c.b16 %v733, %v729
        %v906 = vpack.c.b16 %v734, %v730
        %v907 = vpack.c.b16 %v739, %v735
        %v908 = vpack.c.b16 %v740, %v736
        %v909 = vpack.c.b16 %v741, %v737
        %v910 = vpack.c.b16 %v742, %v738
        %v911 = vpack.c.b16 %v747, %v743
        %v912 = vpack.c.b16 %v748, %v744
        %v913 = vpack.c.b16 %v749, %v745
        %v914 = vpack.c.b16 %v750, %v746
        %v915 = vpack.c.b16 %v755, %v751
        %v916 = vpack.c.b16 %v756, %v752
        %v917 = vpack.c.b16 %v757, %v753
        %v918 = vpack.c.b16 %v758, %v754
        %v919 = vpack.c.b16 %v763, %v759
        %v920 = vpack.c.b16 %v764, %v760
        %v921 = vpack.c.b16 %v765, %v761
        %v922 = vpack.c.b16 %v766, %v762
        %v923 = vpack.c.b16 %v771, %v767
        %v924 = vpack.c.b16 %v772, %v768
        %v925 = vpack.c.b16 %v773, %v769
        %v926 = vpack.c.b16 %v774, %v770
        %v927 = vpack.c.b16 %v779, %v775
        %v928 = vpack.c.b16 %v780, %v776
        %v929 = vpack.c.b16 %v781, %v777
        %v930 = vpack.c.b16 %v782, %v778
        %v931 = vpack.c.b16 %v787, %v783
        %v932 = vpack.c.b16 %v788, %v784
        %v933 = vpack.c.b16 %v789, %v785
        %v934 = vpack.c.b16 %v790, %v786
        %v935 = vpack.c.b16 %v795, %v791
        %v936 = vpack.c.b16 %v796, %v792
        %v937 = vpack.c.b16 %v797, %v793
        %v938 = vpack.c.b16 %v798, %v794
        %v939 = vpack.c.b16 %v803, %v799
        %v940 = vpack.c.b16 %v804, %v800
        %v941 = vpack.c.b16 %v805, %v801
        %v942 = vpack.c.b16 %v806, %v802
        %v943 = vpack.c.b16 %v811, %v807
        %v944 = vpack.c.b16 %v812, %v808
        %v945 = vpack.c.b16 %v813, %v809
        %v946 = vpack.c.b16 %v814, %v810
        %v947 = vpack.c.b16 %v819, %v815
        %v948 = vpack.c.b16 %v820, %v816
        %v949 = vpack.c.b16 %v821, %v817
        %v950 = vpack.c.b16 %v822, %v818
        %v1096 = vunpack.c.l.b16 %v390
        %v1097 = vunpack.c.l.b16 %v391
        %v1098 = vunpack.c.l.b16 %v392
        %v1099 = vunpack.c.l.b16 %v393
        %v1100 = vunpack.c.l.b16 %v394
        %v1101 = vunpack.c.l.b16 %v395
        %v1102 = vunpack.c.l.b16 %v396
        %v1103 = vunpack.c.l.b16 %v397
        %v1104 = vunpack.c.l.b16 %v398
        %v1105 = vunpack.c.l.b16 %v399
        %v1106 = vunpack.c.l.b16 %v400
        %v1107 = vunpack.c.l.b16 %v401
        %v1108 = vunpack.c.l.b16 %v402
        %v1109 = vunpack.c.l.b16 %v403
        %v1110 = vunpack.c.l.b16 %v404
        %v1111 = vunpack.c.l.b16 %v405
        %v1112 = vunpack.c.l.b16 %v406
        %v1113 = vunpack.c.l.b16 %v407
        %v1114 = vunpack.c.l.b16 %v408
        %v1115 = vunpack.c.l.b16 %v409
        %v1116 = vunpack.c.l.b16 %v410
        %v1117 = vunpack.c.l.b16 %v411
        %v1118 = vunpack.c.l.b16 %v412
        %v1119 = vunpack.c.l.b16 %v413
        %v1120 = vunpack.c.l.b16 %v414
        %v1121 = vunpack.c.l.b16 %v415
        %v1122 = vunpack.c.l.b16 %v416
        %v1123 = vunpack.c.l.b16 %v417
        %v1124 = vunpack.c.l.b16 %v418
        %v1125 = vunpack.c.l.b16 %v419
        %v1126 = vunpack.c.l.b16 %v420
        %v1127 = vunpack.c.l.b16 %v421
        %v1128 = vunpack.c.l.b16 %v422
        %v1129 = vunpack.c.l.b16 %v423
        %v1130 = vunpack.c.l.b16 %v424
        %v1131 = vunpack.c.l.b16 %v425
        %v1132 = vunpack.c.l.b16 %v426
        %v1133 = vunpack.c.l.b16 %v427
        %v1134 = vunpack.c.l.b16 %v428
        %v1135 = vunpack.c.l.b16 %v429
        %v1136 = vunpack.c.l.b16 %v430
        %v1137 = vunpack.c.l.b16 %v431
        %v1138 = vunpack.c.l.b16 %v432
        %v1139 = vunpack.c.l.b16 %v433
        %v1140 = vunpack.c.l.b16 %v434
        %v1141 = vunpack.c.l.b16 %v435
        %v1142 = vunpack.c.l.b16 %v436
        %v1143 = vunpack.c.l.b16 %v437
        %v1144 = vunpack.c.l.b16 %v438
        %v1145 = vpack.c.b16 %v1097, %v1096
        %v1146 = vpack.c.b16 %v1099, %v1098
        %v1147 = vpack.c.b16 %v1101, %v1100
        %v1148 = vpack.c.b16 %v1103, %v1102
        %v1149 = vpack.c.b16 %v1105, %v1104
        %v1150 = vpack.c.b16 %v1107, %v1106
        %v1151 = vpack.c.b16 %v1109, %v1108
        %v1152 = vpack.c.b16 %v1111, %v1110
        %v1153 = vpack.c.b16 %v1113, %v1112
        %v1154 = vpack.c.b16 %v1115, %v1114
        %v1155 = vpack.c.b16 %v1117, %v1116
        %v1156 = vpack.c.b16 %v1119, %v1118
        %v1157 = vpack.c.b16 %v1121, %v1120
        %v1158 = vpack.c.b16 %v1123, %v1122
        %v1159 = vpack.c.b16 %v1125, %v1124
        %v1160 = vpack.c.b16 %v1127, %v1126
        %v1161 = vpack.c.b16 %v1129, %v1128
        %v1162 = vpack.c.b16 %v1131, %v1130
        %v1163 = vpack.c.b16 %v1133, %v1132
        %v1164 = vpack.c.b16 %v1135, %v1134
        %v1165 = vpack.c.b16 %v1137, %v1136
        %v1166 = vpack.c.b16 %v1139, %v1138
        %v1167 = vpack.c.b16 %v1141, %v1140
        %v1168 = vpack.c.b16 %v1143, %v1142
        %v1169 = vpack.c.b16 %v1144, %v1144
        %vm1194 = vcmask 64512
        %v1196 = vsel %vm1194, %v826, 0
        %v1199 = vsel %vm1194, %v830, 0
        %v1202 = vsel %vm1194, %v834, 0
        %v1205 = vsel %vm1194, %v838, 0
        %v1208 = vsel %vm1194, %v842, 0
        %v1211 = vsel %vm1194, %v846, 0
        %v1214 = vsel %vm1194, %v850, 0
        %v1217 = vsel %vm1194, %v854, 0
        %v1220 = vsel %vm1194, %v858, 0
        %v1223 = vsel %vm1194, %v862, 0
        %v1226 = vsel %vm1194, %v866, 0
        %v1229 = vsel %vm1194, %v870, 0
        %v1232 = vsel %vm1194, %v874, 0
        %v1235 = vsel %vm1194, %v878, 0
        %v1238 = vsel %vm1194, %v882, 0
        %v1241 = vsel %vm1194, %v886, 0
        %v1244 = vsel %vm1194, %v890, 0
        %v1247 = vsel %vm1194, %v894, 0
        %v1250 = vsel %vm1194, %v898, 0
        %v1253 = vsel %vm1194, %v902, 0
        %v1256 = vsel %vm1194, %v906, 0
        %v1259 = vsel %vm1194, %v910, 0
        %v1262 = vsel %vm1194, %v914, 0
        %v1265 = vsel %vm1194, %v918, 0
        %v1268 = vsel %vm1194, %v922, 0
        %v1271 = vsel %vm1194, %v926, 0
        %v1274 = vsel %vm1194, %v930, 0
        %v1277 = vsel %vm1194, %v934, 0
        %v1280 = vsel %vm1194, %v938, 0
        %v1283 = vsel %vm1194, %v942, 0
        %v1286 = vsel %vm1194, %v946, 0
        %v1289 = vsel %vm1194, %v950, 0
        %vm1291 = vcmask 1043456
        %v1293 = vsel %vm1291, %v1169, 0
        %1295 = vmatpush.bf16.msra.mxu0 %v1152
        %1296 = vmatpush.bf16.msra.mxu0 %v1151
        %1297 = vmatpush.bf16.msra.mxu0 %v1150
        %1298 = vmatpush.bf16.msra.mxu0 %v1149
        %1299 = vmatpush.bf16.msra.mxu0 %v1148
        %1300 = vmatpush.bf16.msra.mxu0 %v1147
        %1301 = vmatpush.bf16.msra.mxu0 %v1146
        %1302 = vmatpush.bf16.msra.mxu0 %v1145
        %1303 = vmatmul.bf16.gmra.mxu0 %v823
        %v1304 = vpop.f32.mrf.mxu0
        %v1305 = vadd.f32 0.0, %v1304
        %v1306 = vpop.f32.mrf.mxu0
        %v1307 = vadd.f32 0.0, %v1306
        %1308 = vmatmul.bf16.gmra.mxu0 %v827
        %v1309 = vpop.f32.mrf.mxu0
        %v1310 = vadd.f32 0.0, %v1309
        %v1311 = vpop.f32.mrf.mxu0
        %v1312 = vadd.f32 0.0, %v1311
        %1313 = vmatmul.bf16.gmra.mxu0 %v831
        %v1314 = vpop.f32.mrf.mxu0
        %v1315 = vadd.f32 0.0, %v1314
        %v1316 = vpop.f32.mrf.mxu0
        %v1317 = vadd.f32 0.0, %v1316
        %1318 = vmatmul.bf16.gmra.mxu0 %v835
        %v1319 = vpop.f32.mrf.mxu0
        %v1320 = vadd.f32 0.0, %v1319
        %v1321 = vpop.f32.mrf.mxu0
        %v1322 = vadd.f32 0.0, %v1321
        %1323 = vmatmul.bf16.gmra.mxu0 %v839
        %v1324 = vpop.f32.mrf.mxu0
        %v1325 = vadd.f32 0.0, %v1324
        %v1326 = vpop.f32.mrf.mxu0
        %v1327 = vadd.f32 0.0, %v1326
        %1328 = vmatmul.bf16.gmra.mxu0 %v843
        %v1329 = vpop.f32.mrf.mxu0
        %v1330 = vadd.f32 0.0, %v1329
        %v1331 = vpop.f32.mrf.mxu0
        %v1332 = vadd.f32 0.0, %v1331
        %1333 = vmatmul.bf16.gmra.mxu0 %v847
        %v1334 = vpop.f32.mrf.mxu0
        %v1335 = vadd.f32 0.0, %v1334
        %v1336 = vpop.f32.mrf.mxu0
        %v1337 = vadd.f32 0.0, %v1336
        %1338 = vmatmul.bf16.gmra.mxu0 %v851
        %v1339 = vpop.f32.mrf.mxu0
        %v1340 = vadd.f32 0.0, %v1339
        %v1341 = vpop.f32.mrf.mxu0
        %v1342 = vadd.f32 0.0, %v1341
        %1343 = vmatmul.bf16.gmra.mxu0 %v855
        %v1344 = vpop.f32.mrf.mxu0
        %v1345 = vadd.f32 0.0, %v1344
        %v1346 = vpop.f32.mrf.mxu0
        %v1347 = vadd.f32 0.0, %v1346
        %1348 = vmatmul.bf16.gmra.mxu0 %v859
        %v1349 = vpop.f32.mrf.mxu0
        %v1350 = vadd.f32 0.0, %v1349
        %v1351 = vpop.f32.mrf.mxu0
        %v1352 = vadd.f32 0.0, %v1351
        %1353 = vmatmul.bf16.gmra.mxu0 %v863
        %v1354 = vpop.f32.mrf.mxu0
        %v1355 = vadd.f32 0.0, %v1354
        %v1356 = vpop.f32.mrf.mxu0
        %v1357 = vadd.f32 0.0, %v1356
        %1358 = vmatmul.bf16.gmra.mxu0 %v867
        %v1359 = vpop.f32.mrf.mxu0
        %v1360 = vadd.f32 0.0, %v1359
        %v1361 = vpop.f32.mrf.mxu0
        %v1362 = vadd.f32 0.0, %v1361
        %1363 = vmatmul.bf16.gmra.mxu0 %v871
        %v1364 = vpop.f32.mrf.mxu0
        %v1365 = vadd.f32 0.0, %v1364
        %v1366 = vpop.f32.mrf.mxu0
        %v1367 = vadd.f32 0.0, %v1366
        %1368 = vmatmul.bf16.gmra.mxu0 %v875
        %v1369 = vpop.f32.mrf.mxu0
        %v1370 = vadd.f32 0.0, %v1369
        %v1371 = vpop.f32.mrf.mxu0
        %v1372 = vadd.f32 0.0, %v1371
        %1373 = vmatmul.bf16.gmra.mxu0 %v879
        %v1374 = vpop.f32.mrf.mxu0
        %v1375 = vadd.f32 0.0, %v1374
        %v1376 = vpop.f32.mrf.mxu0
        %v1377 = vadd.f32 0.0, %v1376
        %1378 = vmatmul.bf16.gmra.mxu0 %v883
        %v1379 = vpop.f32.mrf.mxu0
        %v1380 = vadd.f32 0.0, %v1379
        %v1381 = vpop.f32.mrf.mxu0
        %v1382 = vadd.f32 0.0, %v1381
        %1383 = vmatmul.bf16.gmra.mxu0 %v887
        %v1384 = vpop.f32.mrf.mxu0
        %v1385 = vadd.f32 0.0, %v1384
        %v1386 = vpop.f32.mrf.mxu0
        %v1387 = vadd.f32 0.0, %v1386
        %1388 = vmatmul.bf16.gmra.mxu0 %v891
        %v1389 = vpop.f32.mrf.mxu0
        %v1390 = vadd.f32 0.0, %v1389
        %v1391 = vpop.f32.mrf.mxu0
        %v1392 = vadd.f32 0.0, %v1391
        %1393 = vmatmul.bf16.gmra.mxu0 %v895
        %v1394 = vpop.f32.mrf.mxu0
        %v1395 = vadd.f32 0.0, %v1394
        %v1396 = vpop.f32.mrf.mxu0
        %v1397 = vadd.f32 0.0, %v1396
        %1398 = vmatmul.bf16.gmra.mxu0 %v899
        %v1399 = vpop.f32.mrf.mxu0
        %v1400 = vadd.f32 0.0, %v1399
        %v1401 = vpop.f32.mrf.mxu0
        %v1402 = vadd.f32 0.0, %v1401
        %1403 = vmatmul.bf16.gmra.mxu0 %v903
        %v1404 = vpop.f32.mrf.mxu0
        %v1405 = vadd.f32 0.0, %v1404
        %v1406 = vpop.f32.mrf.mxu0
        %v1407 = vadd.f32 0.0, %v1406
        %1408 = vmatmul.bf16.gmra.mxu0 %v907
        %v1409 = vpop.f32.mrf.mxu0
        %v1410 = vadd.f32 0.0, %v1409
        %v1411 = vpop.f32.mrf.mxu0
        %v1412 = vadd.f32 0.0, %v1411
        %1413 = vmatmul.bf16.gmra.mxu0 %v911
        %v1414 = vpop.f32.mrf.mxu0
        %v1415 = vadd.f32 0.0, %v1414
        %v1416 = vpop.f32.mrf.mxu0
        %v1417 = vadd.f32 0.0, %v1416
        %1418 = vmatmul.bf16.gmra.mxu0 %v915
        %v1419 = vpop.f32.mrf.mxu0
        %v1420 = vadd.f32 0.0, %v1419
        %v1421 = vpop.f32.mrf.mxu0
        %v1422 = vadd.f32 0.0, %v1421
        %1423 = vmatmul.bf16.gmra.mxu0 %v919
        %v1424 = vpop.f32.mrf.mxu0
        %v1425 = vadd.f32 0.0, %v1424
        %v1426 = vpop.f32.mrf.mxu0
        %v1427 = vadd.f32 0.0, %v1426
        %1428 = vmatmul.bf16.gmra.mxu0 %v923
        %v1429 = vpop.f32.mrf.mxu0
        %v1430 = vadd.f32 0.0, %v1429
        %v1431 = vpop.f32.mrf.mxu0
        %v1432 = vadd.f32 0.0, %v1431
        %1433 = vmatmul.bf16.gmra.mxu0 %v927
        %v1434 = vpop.f32.mrf.mxu0
        %v1435 = vadd.f32 0.0, %v1434
        %v1436 = vpop.f32.mrf.mxu0
        %v1437 = vadd.f32 0.0, %v1436
        %1438 = vmatmul.bf16.gmra.mxu0 %v931
        %v1439 = vpop.f32.mrf.mxu0
        %v1440 = vadd.f32 0.0, %v1439
        %v1441 = vpop.f32.mrf.mxu0
        %v1442 = vadd.f32 0.0, %v1441
        %1443 = vmatmul.bf16.gmra.mxu0 %v935
        %v1444 = vpop.f32.mrf.mxu0
        %v1445 = vadd.f32 0.0, %v1444
        %v1446 = vpop.f32.mrf.mxu0
        %v1447 = vadd.f32 0.0, %v1446
        %1448 = vmatmul.bf16.gmra.mxu0 %v939
        %v1449 = vpop.f32.mrf.mxu0
        %v1450 = vadd.f32 0.0, %v1449
        %v1451 = vpop.f32.mrf.mxu0
        %v1452 = vadd.f32 0.0, %v1451
        %1453 = vmatmul.bf16.gmra.mxu0 %v943
        %v1454 = vpop.f32.mrf.mxu0
        %v1455 = vadd.f32 0.0, %v1454
        %v1456 = vpop.f32.mrf.mxu0
        %v1457 = vadd.f32 0.0, %v1456
        %1458 = vmatmul.bf16.gmra.mxu0 %v947
        %v1459 = vpop.f32.mrf.mxu0
        %v1460 = vadd.f32 0.0, %v1459
        %v1461 = vpop.f32.mrf.mxu0
        %v1462 = vadd.f32 0.0, %v1461
        %1463 = vdwg.mxu0
        %1464 = vmatpush.bf16.msra.mxu0 %v1160
        %1465 = vmatpush.bf16.msra.mxu0 %v1159
        %1466 = vmatpush.bf16.msra.mxu0 %v1158
        %1467 = vmatpush.bf16.msra.mxu0 %v1157
        %1468 = vmatpush.bf16.msra.mxu0 %v1156
        %1469 = vmatpush.bf16.msra.mxu0 %v1155
        %1470 = vmatpush.bf16.msra.mxu0 %v1154
        %1471 = vmatpush.bf16.msra.mxu0 %v1153
        %1472 = vmatmul.bf16.gmra.mxu0 %v824
        %v1473 = vpop.f32.mrf.mxu0
        %v1474 = vadd.f32 %v1305, %v1473
        %v1475 = vpop.f32.mrf.mxu0
        %v1476 = vadd.f32 %v1307, %v1475
        %1477 = vmatmul.bf16.gmra.mxu0 %v828
        %v1478 = vpop.f32.mrf.mxu0
        %v1479 = vadd.f32 %v1310, %v1478
        %v1480 = vpop.f32.mrf.mxu0
        %v1481 = vadd.f32 %v1312, %v1480
        %1482 = vmatmul.bf16.gmra.mxu0 %v832
        %v1483 = vpop.f32.mrf.mxu0
        %v1484 = vadd.f32 %v1315, %v1483
        %v1485 = vpop.f32.mrf.mxu0
        %v1486 = vadd.f32 %v1317, %v1485
        %1487 = vmatmul.bf16.gmra.mxu0 %v836
        %v1488 = vpop.f32.mrf.mxu0
        %v1489 = vadd.f32 %v1320, %v1488
        %v1490 = vpop.f32.mrf.mxu0
        %v1491 = vadd.f32 %v1322, %v1490
        %1492 = vmatmul.bf16.gmra.mxu0 %v840
        %v1493 = vpop.f32.mrf.mxu0
        %v1494 = vadd.f32 %v1325, %v1493
        %v1495 = vpop.f32.mrf.mxu0
        %v1496 = vadd.f32 %v1327, %v1495
        %1497 = vmatmul.bf16.gmra.mxu0 %v844
        %v1498 = vpop.f32.mrf.mxu0
        %v1499 = vadd.f32 %v1330, %v1498
        %v1500 = vpop.f32.mrf.mxu0
        %v1501 = vadd.f32 %v1332, %v1500
        %1502 = vmatmul.bf16.gmra.mxu0 %v848
        %v1503 = vpop.f32.mrf.mxu0
        %v1504 = vadd.f32 %v1335, %v1503
        %v1505 = vpop.f32.mrf.mxu0
        %v1506 = vadd.f32 %v1337, %v1505
        %1507 = vmatmul.bf16.gmra.mxu0 %v852
        %v1508 = vpop.f32.mrf.mxu0
        %v1509 = vadd.f32 %v1340, %v1508
        %v1510 = vpop.f32.mrf.mxu0
        %v1511 = vadd.f32 %v1342, %v1510
        %1512 = vmatmul.bf16.gmra.mxu0 %v856
        %v1513 = vpop.f32.mrf.mxu0
        %v1514 = vadd.f32 %v1345, %v1513
        %v1515 = vpop.f32.mrf.mxu0
        %v1516 = vadd.f32 %v1347, %v1515
        %1517 = vmatmul.bf16.gmra.mxu0 %v860
        %v1518 = vpop.f32.mrf.mxu0
        %v1519 = vadd.f32 %v1350, %v1518
        %v1520 = vpop.f32.mrf.mxu0
        %v1521 = vadd.f32 %v1352, %v1520
        %1522 = vmatmul.bf16.gmra.mxu0 %v864
        %v1523 = vpop.f32.mrf.mxu0
        %v1524 = vadd.f32 %v1355, %v1523
        %v1525 = vpop.f32.mrf.mxu0
        %v1526 = vadd.f32 %v1357, %v1525
        %1527 = vmatmul.bf16.gmra.mxu0 %v868
        %v1528 = vpop.f32.mrf.mxu0
        %v1529 = vadd.f32 %v1360, %v1528
        %v1530 = vpop.f32.mrf.mxu0
        %v1531 = vadd.f32 %v1362, %v1530
        %1532 = vmatmul.bf16.gmra.mxu0 %v872
        %v1533 = vpop.f32.mrf.mxu0
        %v1534 = vadd.f32 %v1365, %v1533
        %v1535 = vpop.f32.mrf.mxu0
        %v1536 = vadd.f32 %v1367, %v1535
        %1537 = vmatmul.bf16.gmra.mxu0 %v876
        %v1538 = vpop.f32.mrf.mxu0
        %v1539 = vadd.f32 %v1370, %v1538
        %v1540 = vpop.f32.mrf.mxu0
        %v1541 = vadd.f32 %v1372, %v1540
        %1542 = vmatmul.bf16.gmra.mxu0 %v880
        %v1543 = vpop.f32.mrf.mxu0
        %v1544 = vadd.f32 %v1375, %v1543
        %v1545 = vpop.f32.mrf.mxu0
        %v1546 = vadd.f32 %v1377, %v1545
        %1547 = vmatmul.bf16.gmra.mxu0 %v884
        %v1548 = vpop.f32.mrf.mxu0
        %v1549 = vadd.f32 %v1380, %v1548
        %v1550 = vpop.f32.mrf.mxu0
        %v1551 = vadd.f32 %v1382, %v1550
        %1552 = vmatmul.bf16.gmra.mxu0 %v888
        %v1553 = vpop.f32.mrf.mxu0
        %v1554 = vadd.f32 %v1385, %v1553
        %v1555 = vpop.f32.mrf.mxu0
        %v1556 = vadd.f32 %v1387, %v1555
        %1557 = vmatmul.bf16.gmra.mxu0 %v892
        %v1558 = vpop.f32.mrf.mxu0
        %v1559 = vadd.f32 %v1390, %v1558
        %v1560 = vpop.f32.mrf.mxu0
        %v1561 = vadd.f32 %v1392, %v1560
        %1562 = vmatmul.bf16.gmra.mxu0 %v896
        %v1563 = vpop.f32.mrf.mxu0
        %v1564 = vadd.f32 %v1395, %v1563
        %v1565 = vpop.f32.mrf.mxu0
        %v1566 = vadd.f32 %v1397, %v1565
        %1567 = vmatmul.bf16.gmra.mxu0 %v900
        %v1568 = vpop.f32.mrf.mxu0
        %v1569 = vadd.f32 %v1400, %v1568
        %v1570 = vpop.f32.mrf.mxu0
        %v1571 = vadd.f32 %v1402, %v1570
        %1572 = vmatmul.bf16.gmra.mxu0 %v904
        %v1573 = vpop.f32.mrf.mxu0
        %v1574 = vadd.f32 %v1405, %v1573
        %v1575 = vpop.f32.mrf.mxu0
        %v1576 = vadd.f32 %v1407, %v1575
        %1577 = vmatmul.bf16.gmra.mxu0 %v908
        %v1578 = vpop.f32.mrf.mxu0
        %v1579 = vadd.f32 %v1410, %v1578
        %v1580 = vpop.f32.mrf.mxu0
        %v1581 = vadd.f32 %v1412, %v1580
        %1582 = vmatmul.bf16.gmra.mxu0 %v912
        %v1583 = vpop.f32.mrf.mxu0
        %v1584 = vadd.f32 %v1415, %v1583
        %v1585 = vpop.f32.mrf.mxu0
        %v1586 = vadd.f32 %v1417, %v1585
        %1587 = vmatmul.bf16.gmra.mxu0 %v916
        %v1588 = vpop.f32.mrf.mxu0
        %v1589 = vadd.f32 %v1420, %v1588
        %v1590 = vpop.f32.mrf.mxu0
        %v1591 = vadd.f32 %v1422, %v1590
        %1592 = vmatmul.bf16.gmra.mxu0 %v920
        %v1593 = vpop.f32.mrf.mxu0
        %v1594 = vadd.f32 %v1425, %v1593
        %v1595 = vpop.f32.mrf.mxu0
        %v1596 = vadd.f32 %v1427, %v1595
        %1597 = vmatmul.bf16.gmra.mxu0 %v924
        %v1598 = vpop.f32.mrf.mxu0
        %v1599 = vadd.f32 %v1430, %v1598
        %v1600 = vpop.f32.mrf.mxu0
        %v1601 = vadd.f32 %v1432, %v1600
        %1602 = vmatmul.bf16.gmra.mxu0 %v928
        %v1603 = vpop.f32.mrf.mxu0
        %v1604 = vadd.f32 %v1435, %v1603
        %v1605 = vpop.f32.mrf.mxu0
        %v1606 = vadd.f32 %v1437, %v1605
        %1607 = vmatmul.bf16.gmra.mxu0 %v932
        %v1608 = vpop.f32.mrf.mxu0
        %v1609 = vadd.f32 %v1440, %v1608
        %v1610 = vpop.f32.mrf.mxu0
        %v1611 = vadd.f32 %v1442, %v1610
        %1612 = vmatmul.bf16.gmra.mxu0 %v936
        %v1613 = vpop.f32.mrf.mxu0
        %v1614 = vadd.f32 %v1445, %v1613
        %v1615 = vpop.f32.mrf.mxu0
        %v1616 = vadd.f32 %v1447, %v1615
        %1617 = vmatmul.bf16.gmra.mxu0 %v940
        %v1618 = vpop.f32.mrf.mxu0
        %v1619 = vadd.f32 %v1450, %v1618
        %v1620 = vpop.f32.mrf.mxu0
        %v1621 = vadd.f32 %v1452, %v1620
        %1622 = vmatmul.bf16.gmra.mxu0 %v944
        %v1623 = vpop.f32.mrf.mxu0
        %v1624 = vadd.f32 %v1455, %v1623
        %v1625 = vpop.f32.mrf.mxu0
        %v1626 = vadd.f32 %v1457, %v1625
        %1627 = vmatmul.bf16.gmra.mxu0 %v948
        %v1628 = vpop.f32.mrf.mxu0
        %v1629 = vadd.f32 %v1460, %v1628
        %v1630 = vpop.f32.mrf.mxu0
        %v1631 = vadd.f32 %v1462, %v1630
        %1632 = vdwg.mxu0
        %1633 = vmatpush.bf16.msra.mxu0 %v1168
        %1634 = vmatpush.bf16.msra.mxu0 %v1167
        %1635 = vmatpush.bf16.msra.mxu0 %v1166
        %1636 = vmatpush.bf16.msra.mxu0 %v1165
        %1637 = vmatpush.bf16.msra.mxu0 %v1164
        %1638 = vmatpush.bf16.msra.mxu0 %v1163
        %1639 = vmatpush.bf16.msra.mxu0 %v1162
        %1640 = vmatpush.bf16.msra.mxu0 %v1161
        %1641 = vmatmul.bf16.gmra.mxu0 %v825
        %v1642 = vpop.f32.mrf.mxu0
        %v1643 = vadd.f32 %v1474, %v1642
        %v1644 = vpop.f32.mrf.mxu0
        %v1645 = vadd.f32 %v1476, %v1644
        %1646 = vmatmul.bf16.gmra.mxu0 %v829
        %v1647 = vpop.f32.mrf.mxu0
        %v1648 = vadd.f32 %v1479, %v1647
        %v1649 = vpop.f32.mrf.mxu0
        %v1650 = vadd.f32 %v1481, %v1649
        %1651 = vmatmul.bf16.gmra.mxu0 %v833
        %v1652 = vpop.f32.mrf.mxu0
        %v1653 = vadd.f32 %v1484, %v1652
        %v1654 = vpop.f32.mrf.mxu0
        %v1655 = vadd.f32 %v1486, %v1654
        %1656 = vmatmul.bf16.gmra.mxu0 %v837
        %v1657 = vpop.f32.mrf.mxu0
        %v1658 = vadd.f32 %v1489, %v1657
        %v1659 = vpop.f32.mrf.mxu0
        %v1660 = vadd.f32 %v1491, %v1659
        %1661 = vmatmul.bf16.gmra.mxu0 %v841
        %v1662 = vpop.f32.mrf.mxu0
        %v1663 = vadd.f32 %v1494, %v1662
        %v1664 = vpop.f32.mrf.mxu0
        %v1665 = vadd.f32 %v1496, %v1664
        %1666 = vmatmul.bf16.gmra.mxu0 %v845
        %v1667 = vpop.f32.mrf.mxu0
        %v1668 = vadd.f32 %v1499, %v1667
        %v1669 = vpop.f32.mrf.mxu0
        %v1670 = vadd.f32 %v1501, %v1669
        %1671 = vmatmul.bf16.gmra.mxu0 %v849
        %v1672 = vpop.f32.mrf.mxu0
        %v1673 = vadd.f32 %v1504, %v1672
        %v1674 = vpop.f32.mrf.mxu0
        %v1675 = vadd.f32 %v1506, %v1674
        %1676 = vmatmul.bf16.gmra.mxu0 %v853
        %v1677 = vpop.f32.mrf.mxu0
        %v1678 = vadd.f32 %v1509, %v1677
        %v1679 = vpop.f32.mrf.mxu0
        %v1680 = vadd.f32 %v1511, %v1679
        %1681 = vmatmul.bf16.gmra.mxu0 %v857
        %v1682 = vpop.f32.mrf.mxu0
        %v1683 = vadd.f32 %v1514, %v1682
        %v1684 = vpop.f32.mrf.mxu0
        %v1685 = vadd.f32 %v1516, %v1684
        %1686 = vmatmul.bf16.gmra.mxu0 %v861
        %v1687 = vpop.f32.mrf.mxu0
        %v1688 = vadd.f32 %v1519, %v1687
        %v1689 = vpop.f32.mrf.mxu0
        %v1690 = vadd.f32 %v1521, %v1689
        %1691 = vmatmul.bf16.gmra.mxu0 %v865
        %v1692 = vpop.f32.mrf.mxu0
        %v1693 = vadd.f32 %v1524, %v1692
        %v1694 = vpop.f32.mrf.mxu0
        %v1695 = vadd.f32 %v1526, %v1694
        %1696 = vmatmul.bf16.gmra.mxu0 %v869
        %v1697 = vpop.f32.mrf.mxu0
        %v1698 = vadd.f32 %v1529, %v1697
        %v1699 = vpop.f32.mrf.mxu0
        %v1700 = vadd.f32 %v1531, %v1699
        %1701 = vmatmul.bf16.gmra.mxu0 %v873
        %v1702 = vpop.f32.mrf.mxu0
        %v1703 = vadd.f32 %v1534, %v1702
        %v1704 = vpop.f32.mrf.mxu0
        %v1705 = vadd.f32 %v1536, %v1704
        %1706 = vmatmul.bf16.gmra.mxu0 %v877
        %v1707 = vpop.f32.mrf.mxu0
        %v1708 = vadd.f32 %v1539, %v1707
        %v1709 = vpop.f32.mrf.mxu0
        %v1710 = vadd.f32 %v1541, %v1709
        %1711 = vmatmul.bf16.gmra.mxu0 %v881
        %v1712 = vpop.f32.mrf.mxu0
        %v1713 = vadd.f32 %v1544, %v1712
        %v1714 = vpop.f32.mrf.mxu0
        %v1715 = vadd.f32 %v1546, %v1714
        %1716 = vmatmul.bf16.gmra.mxu0 %v885
        %v1717 = vpop.f32.mrf.mxu0
        %v1718 = vadd.f32 %v1549, %v1717
        %v1719 = vpop.f32.mrf.mxu0
        %v1720 = vadd.f32 %v1551, %v1719
        %1721 = vmatmul.bf16.gmra.mxu0 %v889
        %v1722 = vpop.f32.mrf.mxu0
        %v1723 = vadd.f32 %v1554, %v1722
        %v1724 = vpop.f32.mrf.mxu0
        %v1725 = vadd.f32 %v1556, %v1724
        %1726 = vmatmul.bf16.gmra.mxu0 %v893
        %v1727 = vpop.f32.mrf.mxu0
        %v1728 = vadd.f32 %v1559, %v1727
        %v1729 = vpop.f32.mrf.mxu0
        %v1730 = vadd.f32 %v1561, %v1729
        %1731 = vmatmul.bf16.gmra.mxu0 %v897
        %v1732 = vpop.f32.mrf.mxu0
        %v1733 = vadd.f32 %v1564, %v1732
        %v1734 = vpop.f32.mrf.mxu0
        %v1735 = vadd.f32 %v1566, %v1734
        %1736 = vmatmul.bf16.gmra.mxu0 %v901
        %v1737 = vpop.f32.mrf.mxu0
        %v1738 = vadd.f32 %v1569, %v1737
        %v1739 = vpop.f32.mrf.mxu0
        %v1740 = vadd.f32 %v1571, %v1739
        %1741 = vmatmul.bf16.gmra.mxu0 %v905
        %v1742 = vpop.f32.mrf.mxu0
        %v1743 = vadd.f32 %v1574, %v1742
        %v1744 = vpop.f32.mrf.mxu0
        %v1745 = vadd.f32 %v1576, %v1744
        %1746 = vmatmul.bf16.gmra.mxu0 %v909
        %v1747 = vpop.f32.mrf.mxu0
        %v1748 = vadd.f32 %v1579, %v1747
        %v1749 = vpop.f32.mrf.mxu0
        %v1750 = vadd.f32 %v1581, %v1749
        %1751 = vmatmul.bf16.gmra.mxu0 %v913
        %v1752 = vpop.f32.mrf.mxu0
        %v1753 = vadd.f32 %v1584, %v1752
        %v1754 = vpop.f32.mrf.mxu0
        %v1755 = vadd.f32 %v1586, %v1754
        %1756 = vmatmul.bf16.gmra.mxu0 %v917
        %v1757 = vpop.f32.mrf.mxu0
        %v1758 = vadd.f32 %v1589, %v1757
        %v1759 = vpop.f32.mrf.mxu0
        %v1760 = vadd.f32 %v1591, %v1759
        %1761 = vmatmul.bf16.gmra.mxu0 %v921
        %v1762 = vpop.f32.mrf.mxu0
        %v1763 = vadd.f32 %v1594, %v1762
        %v1764 = vpop.f32.mrf.mxu0
        %v1765 = vadd.f32 %v1596, %v1764
        %1766 = vmatmul.bf16.gmra.mxu0 %v925
        %v1767 = vpop.f32.mrf.mxu0
        %v1768 = vadd.f32 %v1599, %v1767
        %v1769 = vpop.f32.mrf.mxu0
        %v1770 = vadd.f32 %v1601, %v1769
        %1771 = vmatmul.bf16.gmra.mxu0 %v929
        %v1772 = vpop.f32.mrf.mxu0
        %v1773 = vadd.f32 %v1604, %v1772
        %v1774 = vpop.f32.mrf.mxu0
        %v1775 = vadd.f32 %v1606, %v1774
        %1776 = vmatmul.bf16.gmra.mxu0 %v933
        %v1777 = vpop.f32.mrf.mxu0
        %v1778 = vadd.f32 %v1609, %v1777
        %v1779 = vpop.f32.mrf.mxu0
        %v1780 = vadd.f32 %v1611, %v1779
        %1781 = vmatmul.bf16.gmra.mxu0 %v937
        %v1782 = vpop.f32.mrf.mxu0
        %v1783 = vadd.f32 %v1614, %v1782
        %v1784 = vpop.f32.mrf.mxu0
        %v1785 = vadd.f32 %v1616, %v1784
        %1786 = vmatmul.bf16.gmra.mxu0 %v941
        %v1787 = vpop.f32.mrf.mxu0
        %v1788 = vadd.f32 %v1619, %v1787
        %v1789 = vpop.f32.mrf.mxu0
        %v1790 = vadd.f32 %v1621, %v1789
        %1791 = vmatmul.bf16.gmra.mxu0 %v945
        %v1792 = vpop.f32.mrf.mxu0
        %v1793 = vadd.f32 %v1624, %v1792
        %v1794 = vpop.f32.mrf.mxu0
        %v1795 = vadd.f32 %v1626, %v1794
        %1796 = vmatmul.bf16.gmra.mxu0 %v949
        %v1797 = vpop.f32.mrf.mxu0
        %v1798 = vadd.f32 %v1629, %v1797
        %v1799 = vpop.f32.mrf.mxu0
        %v1800 = vadd.f32 %v1631, %v1799
        %1801 = vdwg.mxu0
        %1802 = vmatpush.bf16.msra.mxu0 0
        %1803 = vmatpush.bf16.msra.mxu0 0
        %1804 = vmatpush.bf16.msra.mxu0 0
        %1805 = vmatpush.bf16.msra.mxu0 0
        %1806 = vmatpush.bf16.msra.mxu0 0
        %1807 = vmatpush.bf16.msra.mxu0 0
        %1808 = vmatpush.bf16.msra.mxu0 0
        %1809 = vmatpush.bf16.msra.mxu0 %v1293
        %1810 = vmatmul.bf16.gmra.mxu0 %v1196
        %v1811 = vpop.f32.mrf.mxu0
        %v1812 = vadd.f32 %v1643, %v1811
        %v1813 = vpop.f32.mrf.mxu0
        %v1814 = vadd.f32 %v1645, %v1813
        %1815 = vmatmul.bf16.gmra.mxu0 %v1199
        %v1816 = vpop.f32.mrf.mxu0
        %v1817 = vadd.f32 %v1648, %v1816
        %v1818 = vpop.f32.mrf.mxu0
        %v1819 = vadd.f32 %v1650, %v1818
        %1820 = vmatmul.bf16.gmra.mxu0 %v1202
        %v1821 = vpop.f32.mrf.mxu0
        %v1822 = vadd.f32 %v1653, %v1821
        %v1823 = vpop.f32.mrf.mxu0
        %v1824 = vadd.f32 %v1655, %v1823
        %1825 = vmatmul.bf16.gmra.mxu0 %v1205
        %v1826 = vpop.f32.mrf.mxu0
        %v1827 = vadd.f32 %v1658, %v1826
        %v1828 = vpop.f32.mrf.mxu0
        %v1829 = vadd.f32 %v1660, %v1828
        %1830 = vmatmul.bf16.gmra.mxu0 %v1208
        %v1831 = vpop.f32.mrf.mxu0
        %v1832 = vadd.f32 %v1663, %v1831
        %v1833 = vpop.f32.mrf.mxu0
        %v1834 = vadd.f32 %v1665, %v1833
        %1835 = vmatmul.bf16.gmra.mxu0 %v1211
        %v1836 = vpop.f32.mrf.mxu0
        %v1837 = vadd.f32 %v1668, %v1836
        %v1838 = vpop.f32.mrf.mxu0
        %v1839 = vadd.f32 %v1670, %v1838
        %1840 = vmatmul.bf16.gmra.mxu0 %v1214
        %v1841 = vpop.f32.mrf.mxu0
        %v1842 = vadd.f32 %v1673, %v1841
        %v1843 = vpop.f32.mrf.mxu0
        %v1844 = vadd.f32 %v1675, %v1843
        %1845 = vmatmul.bf16.gmra.mxu0 %v1217
        %v1846 = vpop.f32.mrf.mxu0
        %v1847 = vadd.f32 %v1678, %v1846
        %v1848 = vpop.f32.mrf.mxu0
        %v1849 = vadd.f32 %v1680, %v1848
        %1850 = vmatmul.bf16.gmra.mxu0 %v1220
        %v1851 = vpop.f32.mrf.mxu0
        %v1852 = vadd.f32 %v1683, %v1851
        %v1853 = vpop.f32.mrf.mxu0
        %v1854 = vadd.f32 %v1685, %v1853
        %1855 = vmatmul.bf16.gmra.mxu0 %v1223
        %v1856 = vpop.f32.mrf.mxu0
        %v1857 = vadd.f32 %v1688, %v1856
        %v1858 = vpop.f32.mrf.mxu0
        %v1859 = vadd.f32 %v1690, %v1858
        %1860 = vmatmul.bf16.gmra.mxu0 %v1226
        %v1861 = vpop.f32.mrf.mxu0
        %v1862 = vadd.f32 %v1693, %v1861
        %v1863 = vpop.f32.mrf.mxu0
        %v1864 = vadd.f32 %v1695, %v1863
        %1865 = vmatmul.bf16.gmra.mxu0 %v1229
        %v1866 = vpop.f32.mrf.mxu0
        %v1867 = vadd.f32 %v1698, %v1866
        %v1868 = vpop.f32.mrf.mxu0
        %v1869 = vadd.f32 %v1700, %v1868
        %1870 = vmatmul.bf16.gmra.mxu0 %v1232
        %v1871 = vpop.f32.mrf.mxu0
        %v1872 = vadd.f32 %v1703, %v1871
        %v1873 = vpop.f32.mrf.mxu0
        %v1874 = vadd.f32 %v1705, %v1873
        %1875 = vmatmul.bf16.gmra.mxu0 %v1235
        %v1876 = vpop.f32.mrf.mxu0
        %v1877 = vadd.f32 %v1708, %v1876
        %v1878 = vpop.f32.mrf.mxu0
        %v1879 = vadd.f32 %v1710, %v1878
        %1880 = vmatmul.bf16.gmra.mxu0 %v1238
        %v1881 = vpop.f32.mrf.mxu0
        %v1882 = vadd.f32 %v1713, %v1881
        %v1883 = vpop.f32.mrf.mxu0
        %v1884 = vadd.f32 %v1715, %v1883
        %1885 = vmatmul.bf16.gmra.mxu0 %v1241
        %v1886 = vpop.f32.mrf.mxu0
        %v1887 = vadd.f32 %v1718, %v1886
        %v1888 = vpop.f32.mrf.mxu0
        %v1889 = vadd.f32 %v1720, %v1888
        %1890 = vmatmul.bf16.gmra.mxu0 %v1244
        %v1891 = vpop.f32.mrf.mxu0
        %v1892 = vadd.f32 %v1723, %v1891
        %v1893 = vpop.f32.mrf.mxu0
        %v1894 = vadd.f32 %v1725, %v1893
        %1895 = vmatmul.bf16.gmra.mxu0 %v1247
        %v1896 = vpop.f32.mrf.mxu0
        %v1897 = vadd.f32 %v1728, %v1896
        %v1898 = vpop.f32.mrf.mxu0
        %v1899 = vadd.f32 %v1730, %v1898
        %1900 = vmatmul.bf16.gmra.mxu0 %v1250
        %v1901 = vpop.f32.mrf.mxu0
        %v1902 = vadd.f32 %v1733, %v1901
        %v1903 = vpop.f32.mrf.mxu0
        %v1904 = vadd.f32 %v1735, %v1903
        %1905 = vmatmul.bf16.gmra.mxu0 %v1253
        %v1906 = vpop.f32.mrf.mxu0
        %v1907 = vadd.f32 %v1738, %v1906
        %v1908 = vpop.f32.mrf.mxu0
        %v1909 = vadd.f32 %v1740, %v1908
        %1910 = vmatmul.bf16.gmra.mxu0 %v1256
        %v1911 = vpop.f32.mrf.mxu0
        %v1912 = vadd.f32 %v1743, %v1911
        %v1913 = vpop.f32.mrf.mxu0
        %v1914 = vadd.f32 %v1745, %v1913
        %1915 = vmatmul.bf16.gmra.mxu0 %v1259
        %v1916 = vpop.f32.mrf.mxu0
        %v1917 = vadd.f32 %v1748, %v1916
        %v1918 = vpop.f32.mrf.mxu0
        %v1919 = vadd.f32 %v1750, %v1918
        %1920 = vmatmul.bf16.gmra.mxu0 %v1262
        %v1921 = vpop.f32.mrf.mxu0
        %v1922 = vadd.f32 %v1753, %v1921
        %v1923 = vpop.f32.mrf.mxu0
        %v1924 = vadd.f32 %v1755, %v1923
        %1925 = vmatmul.bf16.gmra.mxu0 %v1265
        %v1926 = vpop.f32.mrf.mxu0
        %v1927 = vadd.f32 %v1758, %v1926
        %v1928 = vpop.f32.mrf.mxu0
        %v1929 = vadd.f32 %v1760, %v1928
        %1930 = vmatmul.bf16.gmra.mxu0 %v1268
        %v1931 = vpop.f32.mrf.mxu0
        %v1932 = vadd.f32 %v1763, %v1931
        %v1933 = vpop.f32.mrf.mxu0
        %v1934 = vadd.f32 %v1765, %v1933
        %1935 = vmatmul.bf16.gmra.mxu0 %v1271
        %v1936 = vpop.f32.mrf.mxu0
        %v1937 = vadd.f32 %v1768, %v1936
        %v1938 = vpop.f32.mrf.mxu0
        %v1939 = vadd.f32 %v1770, %v1938
        %1940 = vmatmul.bf16.gmra.mxu0 %v1274
        %v1941 = vpop.f32.mrf.mxu0
        %v1942 = vadd.f32 %v1773, %v1941
        %v1943 = vpop.f32.mrf.mxu0
        %v1944 = vadd.f32 %v1775, %v1943
        %1945 = vmatmul.bf16.gmra.mxu0 %v1277
        %v1946 = vpop.f32.mrf.mxu0
        %v1947 = vadd.f32 %v1778, %v1946
        %v1948 = vpop.f32.mrf.mxu0
        %v1949 = vadd.f32 %v1780, %v1948
        %1950 = vmatmul.bf16.gmra.mxu0 %v1280
        %v1951 = vpop.f32.mrf.mxu0
        %v1952 = vadd.f32 %v1783, %v1951
        %v1953 = vpop.f32.mrf.mxu0
        %v1954 = vadd.f32 %v1785, %v1953
        %1955 = vmatmul.bf16.gmra.mxu0 %v1283
        %v1956 = vpop.f32.mrf.mxu0
        %v1957 = vadd.f32 %v1788, %v1956
        %v1958 = vpop.f32.mrf.mxu0
        %v1959 = vadd.f32 %v1790, %v1958
        %1960 = vmatmul.bf16.gmra.mxu0 %v1286
        %v1961 = vpop.f32.mrf.mxu0
        %v1962 = vadd.f32 %v1793, %v1961
        %v1963 = vpop.f32.mrf.mxu0
        %v1964 = vadd.f32 %v1795, %v1963
        %1965 = vmatmul.bf16.gmra.mxu0 %v1289
        %v1966 = vpop.f32.mrf.mxu0
        %v1967 = vadd.f32 %v1798, %v1966
        %v1968 = vpop.f32.mrf.mxu0
        %v1969 = vadd.f32 %v1800, %v1968
        %1970 = vdwg.mxu0
        %v1971 = vld [vmem:[%s256] sm:$0x1]
        %v1973 = vperm.slane %v1971, 0
        %v1975 = vmul.f32 %v1812, %v1973
        %v1976 = vmul.f32 %v1814, %v1973
        %v1977 = vmul.f32 %v1817, %v1973
        %v1978 = vmul.f32 %v1819, %v1973
        %v1979 = vmul.f32 %v1822, %v1973
        %v1980 = vmul.f32 %v1824, %v1973
        %v1981 = vmul.f32 %v1827, %v1973
        %v1982 = vmul.f32 %v1829, %v1973
        %v1983 = vmul.f32 %v1832, %v1973
        %v1984 = vmul.f32 %v1834, %v1973
        %v1985 = vmul.f32 %v1837, %v1973
        %v1986 = vmul.f32 %v1839, %v1973
        %v1987 = vmul.f32 %v1842, %v1973
        %v1988 = vmul.f32 %v1844, %v1973
        %v1989 = vmul.f32 %v1847, %v1973
        %v1990 = vmul.f32 %v1849, %v1973
        %v1991 = vmul.f32 %v1852, %v1973
        %v1992 = vmul.f32 %v1854, %v1973
        %v1993 = vmul.f32 %v1857, %v1973
        %v1994 = vmul.f32 %v1859, %v1973
        %v1995 = vmul.f32 %v1862, %v1973
        %v1996 = vmul.f32 %v1864, %v1973
        %v1997 = vmul.f32 %v1867, %v1973
        %v1998 = vmul.f32 %v1869, %v1973
        %v1999 = vmul.f32 %v1872, %v1973
        %v2000 = vmul.f32 %v1874, %v1973
        %v2001 = vmul.f32 %v1877, %v1973
        %v2002 = vmul.f32 %v1879, %v1973
        %v2003 = vmul.f32 %v1882, %v1973
        %v2004 = vmul.f32 %v1884, %v1973
        %v2005 = vmul.f32 %v1887, %v1973
        %v2006 = vmul.f32 %v1889, %v1973
        %v2007 = vmul.f32 %v1892, %v1973
        %v2008 = vmul.f32 %v1894, %v1973
        %v2009 = vmul.f32 %v1897, %v1973
        %v2010 = vmul.f32 %v1899, %v1973
        %v2011 = vmul.f32 %v1902, %v1973
        %v2012 = vmul.f32 %v1904, %v1973
        %v2013 = vmul.f32 %v1907, %v1973
        %v2014 = vmul.f32 %v1909, %v1973
        %v2015 = vmul.f32 %v1912, %v1973
        %v2016 = vmul.f32 %v1914, %v1973
        %v2017 = vmul.f32 %v1917, %v1973
        %v2018 = vmul.f32 %v1919, %v1973
        %v2019 = vmul.f32 %v1922, %v1973
        %v2020 = vmul.f32 %v1924, %v1973
        %v2021 = vmul.f32 %v1927, %v1973
        %v2022 = vmul.f32 %v1929, %v1973
        %v2023 = vmul.f32 %v1932, %v1973
        %v2024 = vmul.f32 %v1934, %v1973
        %v2025 = vmul.f32 %v1937, %v1973
        %v2026 = vmul.f32 %v1939, %v1973
        %v2027 = vmul.f32 %v1942, %v1973
        %v2028 = vmul.f32 %v1944, %v1973
        %v2029 = vmul.f32 %v1947, %v1973
        %v2030 = vmul.f32 %v1949, %v1973
        %v2031 = vmul.f32 %v1952, %v1973
        %v2032 = vmul.f32 %v1954, %v1973
        %v2033 = vmul.f32 %v1957, %v1973
        %v2034 = vmul.f32 %v1959, %v1973
        %v2035 = vmul.f32 %v1962, %v1973
        %v2036 = vmul.f32 %v1964, %v1973
        %v2037 = vmul.f32 %v1967, %v1973
        %v2038 = vmul.f32 %v1969, %v1973
        %v2039 = vld [vmem:[%s259] sm:$0x1]
        %v2041 = vperm.slane %v2039, 0
        %v2043 = vadd.f32 %v1975, %v2041
        %v2044 = vadd.f32 %v1976, %v2041
        %v2045 = vadd.f32 %v1977, %v2041
        %v2046 = vadd.f32 %v1978, %v2041
        %v2047 = vadd.f32 %v1979, %v2041
        %v2048 = vadd.f32 %v1980, %v2041
        %v2049 = vadd.f32 %v1981, %v2041
        %v2050 = vadd.f32 %v1982, %v2041
        %v2051 = vadd.f32 %v1983, %v2041
        %v2052 = vadd.f32 %v1984, %v2041
        %v2053 = vadd.f32 %v1985, %v2041
        %v2054 = vadd.f32 %v1986, %v2041
        %v2055 = vadd.f32 %v1987, %v2041
        %v2056 = vadd.f32 %v1988, %v2041
        %v2057 = vadd.f32 %v1989, %v2041
        %v2058 = vadd.f32 %v1990, %v2041
        %v2059 = vadd.f32 %v1991, %v2041
        %v2060 = vadd.f32 %v1992, %v2041
        %v2061 = vadd.f32 %v1993, %v2041
        %v2062 = vadd.f32 %v1994, %v2041
        %v2063 = vadd.f32 %v1995, %v2041
        %v2064 = vadd.f32 %v1996, %v2041
        %v2065 = vadd.f32 %v1997, %v2041
        %v2066 = vadd.f32 %v1998, %v2041
        %v2067 = vadd.f32 %v1999, %v2041
        %v2068 = vadd.f32 %v2000, %v2041
        %v2069 = vadd.f32 %v2001, %v2041
        %v2070 = vadd.f32 %v2002, %v2041
        %v2071 = vadd.f32 %v2003, %v2041
        %v2072 = vadd.f32 %v2004, %v2041
        %v2073 = vadd.f32 %v2005, %v2041
        %v2074 = vadd.f32 %v2006, %v2041
        %v2075 = vadd.f32 %v2007, %v2041
        %v2076 = vadd.f32 %v2008, %v2041
        %v2077 = vadd.f32 %v2009, %v2041
        %v2078 = vadd.f32 %v2010, %v2041
        %v2079 = vadd.f32 %v2011, %v2041
        %v2080 = vadd.f32 %v2012, %v2041
        %v2081 = vadd.f32 %v2013, %v2041
        %v2082 = vadd.f32 %v2014, %v2041
        %v2083 = vadd.f32 %v2015, %v2041
        %v2084 = vadd.f32 %v2016, %v2041
        %v2085 = vadd.f32 %v2017, %v2041
        %v2086 = vadd.f32 %v2018, %v2041
        %v2087 = vadd.f32 %v2019, %v2041
        %v2088 = vadd.f32 %v2020, %v2041
        %v2089 = vadd.f32 %v2021, %v2041
        %v2090 = vadd.f32 %v2022, %v2041
        %v2091 = vadd.f32 %v2023, %v2041
        %v2092 = vadd.f32 %v2024, %v2041
        %v2093 = vadd.f32 %v2025, %v2041
        %v2094 = vadd.f32 %v2026, %v2041
        %v2095 = vadd.f32 %v2027, %v2041
        %v2096 = vadd.f32 %v2028, %v2041
        %v2097 = vadd.f32 %v2029, %v2041
        %v2098 = vadd.f32 %v2030, %v2041
        %v2099 = vadd.f32 %v2031, %v2041
        %v2100 = vadd.f32 %v2032, %v2041
        %v2101 = vadd.f32 %v2033, %v2041
        %v2102 = vadd.f32 %v2034, %v2041
        %v2103 = vadd.f32 %v2035, %v2041
        %v2104 = vadd.f32 %v2036, %v2041
        %v2105 = vadd.f32 %v2037, %v2041
        %v2106 = vadd.f32 %v2038, %v2041
        %v2107 = vmax.f32 %v2043, 0.0
        %v2108 = vmax.f32 %v2044, 0.0
        %v2109 = vmax.f32 %v2045, 0.0
        %v2110 = vmax.f32 %v2046, 0.0
        %v2111 = vmax.f32 %v2047, 0.0
        %v2112 = vmax.f32 %v2048, 0.0
        %v2113 = vmax.f32 %v2049, 0.0
        %v2114 = vmax.f32 %v2050, 0.0
        %v2115 = vmax.f32 %v2051, 0.0
        %v2116 = vmax.f32 %v2052, 0.0
        %v2117 = vmax.f32 %v2053, 0.0
        %v2118 = vmax.f32 %v2054, 0.0
        %v2119 = vmax.f32 %v2055, 0.0
        %v2120 = vmax.f32 %v2056, 0.0
        %v2121 = vmax.f32 %v2057, 0.0
        %v2122 = vmax.f32 %v2058, 0.0
        %v2123 = vmax.f32 %v2059, 0.0
        %v2124 = vmax.f32 %v2060, 0.0
        %v2125 = vmax.f32 %v2061, 0.0
        %v2126 = vmax.f32 %v2062, 0.0
        %v2127 = vmax.f32 %v2063, 0.0
        %v2128 = vmax.f32 %v2064, 0.0
        %v2129 = vmax.f32 %v2065, 0.0
        %v2130 = vmax.f32 %v2066, 0.0
        %v2131 = vmax.f32 %v2067, 0.0
        %v2132 = vmax.f32 %v2068, 0.0
        %v2133 = vmax.f32 %v2069, 0.0
        %v2134 = vmax.f32 %v2070, 0.0
        %v2135 = vmax.f32 %v2071, 0.0
        %v2136 = vmax.f32 %v2072, 0.0
        %v2137 = vmax.f32 %v2073, 0.0
        %v2138 = vmax.f32 %v2074, 0.0
        %v2139 = vmax.f32 %v2075, 0.0
        %v2140 = vmax.f32 %v2076, 0.0
        %v2141 = vmax.f32 %v2077, 0.0
        %v2142 = vmax.f32 %v2078, 0.0
        %v2143 = vmax.f32 %v2079, 0.0
        %v2144 = vmax.f32 %v2080, 0.0
        %v2145 = vmax.f32 %v2081, 0.0
        %v2146 = vmax.f32 %v2082, 0.0
        %v2147 = vmax.f32 %v2083, 0.0
        %v2148 = vmax.f32 %v2084, 0.0
        %v2149 = vmax.f32 %v2085, 0.0
        %v2150 = vmax.f32 %v2086, 0.0
        %v2151 = vmax.f32 %v2087, 0.0
        %v2152 = vmax.f32 %v2088, 0.0
        %v2153 = vmax.f32 %v2089, 0.0
        %v2154 = vmax.f32 %v2090, 0.0
        %v2155 = vmax.f32 %v2091, 0.0
        %v2156 = vmax.f32 %v2092, 0.0
        %v2157 = vmax.f32 %v2093, 0.0
        %v2158 = vmax.f32 %v2094, 0.0
        %v2159 = vmax.f32 %v2095, 0.0
        %v2160 = vmax.f32 %v2096, 0.0
        %v2161 = vmax.f32 %v2097, 0.0
        %v2162 = vmax.f32 %v2098, 0.0
        %v2163 = vmax.f32 %v2099, 0.0
        %v2164 = vmax.f32 %v2100, 0.0
        %v2165 = vmax.f32 %v2101, 0.0
        %v2166 = vmax.f32 %v2102, 0.0
        %v2167 = vmax.f32 %v2103, 0.0
        %v2168 = vmax.f32 %v2104, 0.0
        %v2169 = vmax.f32 %v2105, 0.0
        %v2170 = vmax.f32 %v2106, 0.0
        %v2171 = vpack.c.bf16 %v2107, %v2107
        %v2172 = vpack.c.bf16 %v2108, %v2108
        %v2173 = vpack.c.bf16 %v2109, %v2109
        %v2174 = vpack.c.bf16 %v2110, %v2110
        %v2175 = vpack.c.bf16 %v2111, %v2111
        %v2176 = vpack.c.bf16 %v2112, %v2112
        %v2177 = vpack.c.bf16 %v2113, %v2113
        %v2178 = vpack.c.bf16 %v2114, %v2114
        %v2179 = vpack.c.bf16 %v2115, %v2115
        %v2180 = vpack.c.bf16 %v2116, %v2116
        %v2181 = vpack.c.bf16 %v2117, %v2117
        %v2182 = vpack.c.bf16 %v2118, %v2118
        %v2183 = vpack.c.bf16 %v2119, %v2119
        %v2184 = vpack.c.bf16 %v2120, %v2120
        %v2185 = vpack.c.bf16 %v2121, %v2121
        %v2186 = vpack.c.bf16 %v2122, %v2122
        %v2187 = vpack.c.bf16 %v2123, %v2123
        %v2188 = vpack.c.bf16 %v2124, %v2124
        %v2189 = vpack.c.bf16 %v2125, %v2125
        %v2190 = vpack.c.bf16 %v2126, %v2126
        %v2191 = vpack.c.bf16 %v2127, %v2127
        %v2192 = vpack.c.bf16 %v2128, %v2128
        %v2193 = vpack.c.bf16 %v2129, %v2129
        %v2194 = vpack.c.bf16 %v2130, %v2130
        %v2195 = vpack.c.bf16 %v2131, %v2131
        %v2196 = vpack.c.bf16 %v2132, %v2132
        %v2197 = vpack.c.bf16 %v2133, %v2133
        %v2198 = vpack.c.bf16 %v2134, %v2134
        %v2199 = vpack.c.bf16 %v2135, %v2135
        %v2200 = vpack.c.bf16 %v2136, %v2136
        %v2201 = vpack.c.bf16 %v2137, %v2137
        %v2202 = vpack.c.bf16 %v2138, %v2138
        %v2203 = vpack.c.bf16 %v2139, %v2139
        %v2204 = vpack.c.bf16 %v2140, %v2140
        %v2205 = vpack.c.bf16 %v2141, %v2141
        %v2206 = vpack.c.bf16 %v2142, %v2142
        %v2207 = vpack.c.bf16 %v2143, %v2143
        %v2208 = vpack.c.bf16 %v2144, %v2144
        %v2209 = vpack.c.bf16 %v2145, %v2145
        %v2210 = vpack.c.bf16 %v2146, %v2146
        %v2211 = vpack.c.bf16 %v2147, %v2147
        %v2212 = vpack.c.bf16 %v2148, %v2148
        %v2213 = vpack.c.bf16 %v2149, %v2149
        %v2214 = vpack.c.bf16 %v2150, %v2150
        %v2215 = vpack.c.bf16 %v2151, %v2151
        %v2216 = vpack.c.bf16 %v2152, %v2152
        %v2217 = vpack.c.bf16 %v2153, %v2153
        %v2218 = vpack.c.bf16 %v2154, %v2154
        %v2219 = vpack.c.bf16 %v2155, %v2155
        %v2220 = vpack.c.bf16 %v2156, %v2156
        %v2221 = vpack.c.bf16 %v2157, %v2157
        %v2222 = vpack.c.bf16 %v2158, %v2158
        %v2223 = vpack.c.bf16 %v2159, %v2159
        %v2224 = vpack.c.bf16 %v2160, %v2160
        %v2225 = vpack.c.bf16 %v2161, %v2161
        %v2226 = vpack.c.bf16 %v2162, %v2162
        %v2227 = vpack.c.bf16 %v2163, %v2163
        %v2228 = vpack.c.bf16 %v2164, %v2164
        %v2229 = vpack.c.bf16 %v2165, %v2165
        %v2230 = vpack.c.bf16 %v2166, %v2166
        %v2231 = vpack.c.bf16 %v2167, %v2167
        %v2232 = vpack.c.bf16 %v2168, %v2168
        %v2233 = vpack.c.bf16 %v2169, %v2169
        %v2234 = vpack.c.bf16 %v2170, %v2170
        %2235 = vst [vmem:[%s242] sm:$0xf] %v2171
        %2236 = vst [vmem:[%s242 + $0x4] sm:$0xf] %v2172
        %2237 = vst [vmem:[%s242 + $0x8] sm:$0xf] %v2173
        %2238 = vst [vmem:[%s242 + $0xc] sm:$0xf] %v2174
        %2239 = vst [vmem:[%s242 + $0x10] sm:$0xf] %v2175
        %2240 = vst [vmem:[%s242 + $0x14] sm:$0xf] %v2176
        %2241 = vst [vmem:[%s242 + $0x18] sm:$0xf] %v2177
        %2242 = vst [vmem:[%s242 + $0x1c] sm:$0xf] %v2178
        %2243 = vst [vmem:[%s242 + $0x20] sm:$0xf] %v2179
        %2244 = vst [vmem:[%s242 + $0x24] sm:$0xf] %v2180
        %2245 = vst [vmem:[%s242 + $0x28] sm:$0xf] %v2181
        %2246 = vst [vmem:[%s242 + $0x2c] sm:$0xf] %v2182
        %2247 = vst [vmem:[%s242 + $0x30] sm:$0xf] %v2183
        %2248 = vst [vmem:[%s242 + $0x34] sm:$0xf] %v2184
        %2249 = vst [vmem:[%s242 + $0x38] sm:$0xf] %v2185
        %2250 = vst [vmem:[%s242 + $0x3c] sm:$0xf] %v2186
        %2251 = vst [vmem:[%s242 + $0x40] sm:$0xf] %v2187
        %2252 = vst [vmem:[%s242 + $0x44] sm:$0xf] %v2188
        %2253 = vst [vmem:[%s242 + $0x48] sm:$0xf] %v2189
        %2254 = vst [vmem:[%s242 + $0x4c] sm:$0xf] %v2190
        %2255 = vst [vmem:[%s242 + $0x50] sm:$0xf] %v2191
        %2256 = vst [vmem:[%s242 + $0x54] sm:$0xf] %v2192
        %2257 = vst [vmem:[%s242 + $0x58] sm:$0xf] %v2193
        %2258 = vst [vmem:[%s242 + $0x5c] sm:$0xf] %v2194
        %2259 = vst [vmem:[%s242 + $0x60] sm:$0xf] %v2195
        %2260 = vst [vmem:[%s242 + $0x64] sm:$0xf] %v2196
        %2261 = vst [vmem:[%s242 + $0x68] sm:$0xf] %v2197
        %2262 = vst [vmem:[%s242 + $0x6c] sm:$0xf] %v2198
        %2263 = vst [vmem:[%s242 + $0x70] sm:$0xf] %v2199
        %2264 = vst [vmem:[%s242 + $0x74] sm:$0xf] %v2200
        %2265 = vst [vmem:[%s242 + $0x78] sm:$0xf] %v2201
        %2266 = vst [vmem:[%s242 + $0x7c] sm:$0xf] %v2202
        %2267 = vst [vmem:[%s242 + $0x80] sm:$0xf] %v2203
        %2268 = vst [vmem:[%s242 + $0x84] sm:$0xf] %v2204
        %2269 = vst [vmem:[%s242 + $0x88] sm:$0xf] %v2205
        %2270 = vst [vmem:[%s242 + $0x8c] sm:$0xf] %v2206
        %2271 = vst [vmem:[%s242 + $0x90] sm:$0xf] %v2207
        %2272 = vst [vmem:[%s242 + $0x94] sm:$0xf] %v2208
        %2273 = vst [vmem:[%s242 + $0x98] sm:$0xf] %v2209
        %2274 = vst [vmem:[%s242 + $0x9c] sm:$0xf] %v2210
        %2275 = vst [vmem:[%s242 + $0xa0] sm:$0xf] %v2211
        %2276 = vst [vmem:[%s242 + $0xa4] sm:$0xf] %v2212
        %2277 = vst [vmem:[%s242 + $0xa8] sm:$0xf] %v2213
        %2278 = vst [vmem:[%s242 + $0xac] sm:$0xf] %v2214
        %2279 = vst [vmem:[%s242 + $0xb0] sm:$0xf] %v2215
        %2280 = vst [vmem:[%s242 + $0xb4] sm:$0xf] %v2216
        %2281 = vst [vmem:[%s242 + $0xb8] sm:$0xf] %v2217
        %2282 = vst [vmem:[%s242 + $0xbc] sm:$0xf] %v2218
        %2283 = vst [vmem:[%s242 + $0xc0] sm:$0xf] %v2219
        %2284 = vst [vmem:[%s242 + $0xc4] sm:$0xf] %v2220
        %2285 = vst [vmem:[%s242 + $0xc8] sm:$0xf] %v2221
        %2286 = vst [vmem:[%s242 + $0xcc] sm:$0xf] %v2222
        %2287 = vst [vmem:[%s242 + $0xd0] sm:$0xf] %v2223
        %2288 = vst [vmem:[%s242 + $0xd4] sm:$0xf] %v2224
        %2289 = vst [vmem:[%s242 + $0xd8] sm:$0xf] %v2225
        %2290 = vst [vmem:[%s242 + $0xdc] sm:$0xf] %v2226
        %2291 = vst [vmem:[%s242 + $0xe0] sm:$0xf] %v2227
        %2292 = vst [vmem:[%s242 + $0xe4] sm:$0xf] %v2228
        %2293 = vst [vmem:[%s242 + $0xe8] sm:$0xf] %v2229
        %2294 = vst [vmem:[%s242 + $0xec] sm:$0xf] %v2230
        %2295 = vst [vmem:[%s242 + $0xf0] sm:$0xf] %v2231
        %2296 = vst [vmem:[%s242 + $0xf4] sm:$0xf] %v2232
        %2297 = vst [vmem:[%s242 + $0xf8] sm:$0xf] %v2233
        %2298 = vst [vmem:[%s242 + $0xfc] sm:$0xf] %v2234
        %s2299 = sand.u32 %s144, 1
        %s2300 = scalar_lea.sflag [#allocation3], %s2299
        %s2301 = sand.u32 %s144, 1
        %s2302 = smul.addr %s2301, 256
        %s2303 = scalar_lea.vmem [#allocation2], %s2302
        // Predicated region
        $region37: #{tpu_custom_call.1} parent=35 // pred_check
          %p2304 = pneg %p154
        $region38: #{tpu_custom_call.1} parent=35 // pred_check_branch
          %2306 = sbr.rel (%p2304) target = $region40
        $region39: #{tpu_custom_call.1} parent=35 // pred_region
          %s2307 = smul.u32 64, %s23
          %2309 = vsyncadd %s2300, 0
          %s2310 = sadd.s32 %s22, %s2307
          %s2311 = smul.addr %s2310, 4
          %s2312 = scalar_lea.hbm %s4, %s2311
          %s2313 = sshll.u32 %s2303, 4
          %s2314 = int_to_ptr.vmem [resolvable:$true] %s2313
          %s2315 = sshll.u32 %s2312, 4
          %s2316 = int_to_ptr.hbm [resolvable:$true] %s2315
          %2321 = dma.vmem_to_hbm [thread:$0]  %s2314, 4096, %s2316, %s2300, 64, 64, 4
        $region40: #{tpu_custom_call.1} parent=35 // pred_fallthru
          _
      $region36: #{tpu_custom_call.1} parent=5 // pred_fallthru
        _
      %p2322 = scmp.le.s32.totalorder 2, %s13
      // Predicated region
      $region41: #{tpu_custom_call.1} parent=5 // pred_check
        %p2323 = pneg %p2322
      $region42: #{tpu_custom_call.1} parent=5 // pred_check_branch
        %2325 = sbr.rel (%p2323) target = $region44
      $region43: #{tpu_custom_call.1} parent=5 // pred_region
        %s2326 = ssub.s32 %s13, 2
        // Predicated region
        $region45: #{tpu_custom_call.1} parent=43 // pred_check
          %p2327 = pneg %p160
        $region46: #{tpu_custom_call.1} parent=43 // pred_check_branch
          %2329 = sbr.rel (%p2327) target = $region48
        $region47: #{tpu_custom_call.1} parent=43 // pred_region
          %s2330 = sand.u32 %s145, 1
          %s2331 = scalar_lea.sflag [#allocation3], %s2330
          %s2332 = sand.u32 %s145, 1
          %s2333 = smul.addr %s2332, 256
          %s2334 = scalar_lea.vmem [#allocation2], %s2333
          %2336 = dma.done %s2331, 4096
        $region48: #{tpu_custom_call.1} parent=43 // pred_fallthru
          _
      $region44: #{tpu_custom_call.1} parent=5 // pred_fallthru
        _
    $region6: #{tpu_custom_call.1} parent=1 // loop_footer
      %s17 = sadd.s32 1, %s13
    $region7: #{tpu_custom_call.1} parent=1 // loop_footer_branch
      %12 = sbr.rel target = $region3
    $region8: #{tpu_custom_call.1} parent=1 // loop_exit
      _
    %2337 = vsyncpa [#allocation3], 1
    %s2338 = scalar_lea.sflag [#allocation3], 1
    %2339 = vsyncpa %s2338, 1

</llo_original>
